<compile_context>
chip_gen: v7x
topology: tpu7x:2x2x1
jax: 0.10.0
libtpu: 0.0.40
codegen_flags: <defaults>
</compile_context>

<pallas_src>
import jax
import jax.numpy as jnp
from jax.experimental import pallas as pl
from jax.experimental.pallas import tpu as pltpu


def _link_predictor_kernel(xi_ref, xj_ref, w1_ref, b1_ref, w2_ref, b2_ref, o_ref):
    C = xi_ref.shape[1]
    # Layer 1 on the MXU: concat([xi, xj], 1) @ W1 + b1, split algebraically
    # into two bf16 matmuls against the top / bottom halves of the resident W1
    # (static, alignment-clean ref views; no concatenate, no extra copies).
    # f32 accumulation; bias add / ReLU in f32 on the VPU.
    h = (jnp.dot(xi_ref[...], w1_ref[:C, :], preferred_element_type=jnp.float32)
         + jnp.dot(xj_ref[...], w1_ref[C:, :], preferred_element_type=jnp.float32)
         + b1_ref[...])
    h = jnp.maximum(h, 0.0)                                   # ReLU

    # Layer 2 as an MXU matvec (replaces the old XLU transpose + sublane
    # reduce, which scaled with tile_n and competed for vex issue slots with
    # the MXU pushes).  b2 is a scalar read from SMEM.  Sigmoid -> EUP.
    logits = jnp.dot(h, w2_ref[...], preferred_element_type=jnp.float32) + b2_ref[0, 0]
    o_ref[...] = jax.nn.sigmoid(logits).astype(o_ref.dtype)


def link_predictor(x_i, x_j, w1, b1, w2, b2, *, tile_n=1024):
    """x_i, x_j: [N, C].  w1: [2C, C] (in, out), b1: [C], w2: [C, 1], b2: [1]."""
    N, C = x_i.shape
    assert x_j.shape == (N, C)
    assert w1.shape == (2 * C, C) and b1.shape == (C,)
    assert w2.shape == (C, 1) and b2.shape == (1,)
    assert C % 16 == 0, "feature dim must be sublane-aligned for bf16 tiles"
    assert tile_n % 128 == 0, "tile_n must be a multiple of 128"

    # Stream the HBM-heavy operands in bf16; everything else stays f32.
    x_i = x_i.astype(jnp.bfloat16)
    x_j = x_j.astype(jnp.bfloat16)
    w1 = w1.astype(jnp.bfloat16)
    b1_2d = b1.reshape(1, C).astype(jnp.float32)
    w2_col = w2.reshape(C, 1).astype(jnp.float32)
    b2_2d = b2.reshape(1, 1).astype(jnp.float32)

    # Tile sizing: big tiles amortize per-step overhead; clamp so the grid has
    # >= 2 steps when possible (v7x has 2 TensorCores sharing the parallel
    # axis).  VMEM stays tiny (<~2 MiB) even at 1024 rows in bf16.
    def _round_up(v, m):
        return -(-v // m) * m

    tile_n = min(tile_n, _round_up(N, 128))                 # never bigger than needed
    if N > 128:
        tile_n = min(tile_n, _round_up(pl.cdiv(N, 2), 128))  # keep >= 2 grid steps
    tile_n = max(tile_n, 128)
    num_tiles = pl.cdiv(N, tile_n)                          # ragged tail handled by Pallas

    resident = lambda shape: pl.BlockSpec(shape, lambda i: (0,) * len(shape))

    out = pl.pallas_call(
        _link_predictor_kernel,
        out_shape=jax.ShapeDtypeStruct((N, 1), jnp.float32),
        grid_spec=pltpu.PrefetchScalarGridSpec(
            num_scalar_prefetch=0,
            grid=(num_tiles,),
            in_specs=[
                pl.BlockSpec((tile_n, C), lambda i: (i, 0)),          # x_i (streamed, bf16)
                pl.BlockSpec((tile_n, C), lambda i: (i, 0)),          # x_j (streamed, bf16)
                resident((2 * C, C)),                                  # W1 (VMEM-resident)
                resident((1, C)),                                      # b1
                resident((C, 1)),                                      # w2 column
                pl.BlockSpec(memory_space=pltpu.MemorySpace.SMEM),     # b2 scalar (SMEM)
            ],
            out_specs=pl.BlockSpec((tile_n, 1), lambda i: (i, 0)),
        ),
        compiler_params=pltpu.CompilerParams(
            dimension_semantics=("parallel",),
        ),
    )(x_i, x_j, w1, b1_2d, w2_col, b2_2d)

    return out


def init_params(key, in_channels):
    """Deterministic init matching PyTorch Linear default (U(-1/sqrt(fan_in), +))."""
    k1, k2, k3, k4 = jax.random.split(key, 4)
    fan1 = in_channels * 2
    lim1 = 1.0 / jnp.sqrt(fan1)
    w1 = jax.random.uniform(k1, (fan1, in_channels), jnp.float32, -lim1, lim1)
    b1 = jax.random.uniform(k2, (in_channels,), jnp.float32, -lim1, lim1)
    fan2 = in_channels
    lim2 = 1.0 / jnp.sqrt(fan2)
    w2 = jax.random.uniform(k3, (fan2, 1), jnp.float32, -lim2, lim2)
    b2 = jax.random.uniform(k4, (1,), jnp.float32, -lim2, lim2)
    return w1, b1, w2, b2


if __name__ == "__main__":
    key = jax.random.PRNGKey(0)
    k_xi, k_xj, k_params = jax.random.split(key, 3)

    # N not a multiple of the tile (exercises the ragged last block),
    # C lane-aligned at 128 for full vreg / MXU utilization.
    N, C = 1000, 128
    x_i = jax.random.normal(k_xi, (N, C), jnp.float32)
    x_j = jax.random.normal(k_xj, (N, C), jnp.float32)
    w1, b1, w2, b2 = init_params(k_params, C)

    out = link_predictor(x_i, x_j, w1, b1, w2, b2)
    out = jax.block_until_ready(out)

    # Pure-JAX f32 reference; tolerance loosened for the bf16 streaming path.
    z = jnp.concatenate([x_i, x_j], axis=1)
    ref = jax.nn.sigmoid(jnp.maximum(z @ w1 + b1, 0.0) @ w2 + b2)
    assert out.shape == (N, 1)
    err = float(jnp.max(jnp.abs(out - ref)))
    assert err < 2e-2, err

    print("KERNEL_OK")
</pallas_src>

<mosaic_0001>
module attributes {stable_mosaic.version = 11 : i64} {
  func.func @_link_predictor_kernel(%arg0: i32, %arg1: memref<512x128xbf16, #tpu.memory_space<vmem>>, %arg2: memref<512x128xbf16, #tpu.memory_space<vmem>>, %arg3: memref<256x128xbf16, #tpu.memory_space<vmem>>, %arg4: memref<1x128xf32, #tpu.memory_space<vmem>>, %arg5: memref<128x1xf32, #tpu.memory_space<vmem>>, %arg6: memref<1x1xf32, #tpu.memory_space<smem>>, %arg7: memref<512x1xf32, #tpu.memory_space<vmem>>) attributes {dimension_semantics = [#tpu.dimension_semantics<parallel>], iteration_bounds = array<i64: 2>, scalar_prefetch = 0 : i64, scratch_operands = 0 : i64, tpu.core_type = #tpu.core_type<tc>, window_params = [{transform_indices = @transform_0, window_bounds = array<i64: 512, 128>}, {transform_indices = @transform_1, window_bounds = array<i64: 512, 128>}, {pipeline_mode = #tpu.pipeline_mode<synchronous>, transform_indices = @transform_2, window_bounds = array<i64: 256, 128>}, {pipeline_mode = #tpu.pipeline_mode<synchronous>, transform_indices = @transform_3, window_bounds = array<i64: 1, 128>}, {pipeline_mode = #tpu.pipeline_mode<synchronous>, transform_indices = @transform_4, window_bounds = array<i64: 128, 1>}, {transform_indices = @transform_5, window_bounds = array<i64: 1, 1>}, {transform_indices = @transform_6, window_bounds = array<i64: 512, 1>}]} {
    %c0 = arith.constant 0 : index
    %c0_0 = arith.constant 0 : index
    %0 = vector.load %arg1[%c0, %c0_0] : memref<512x128xbf16, #tpu.memory_space<vmem>>, vector<512x128xbf16>
    %c0_1 = arith.constant 0 : index
    %c0_2 = arith.constant 0 : index
    %1 = vector.load %arg3[%c0_1, %c0_2] : memref<256x128xbf16, #tpu.memory_space<vmem>>, vector<128x128xbf16>
    %cst = arith.constant dense<0.000000e+00> : vector<512x128xf32>
    %2 = tpu.matmul %0, %1, %cst {dimension_numbers = #tpu.dot_dimension_numbers<[1], [0], [0], [1], [0, 0, 1, 1], [], []>} : vector<512x128xbf16>, vector<128x128xbf16>, vector<512x128xf32> -> vector<512x128xf32>
    %c0_3 = arith.constant 0 : index
    %c0_4 = arith.constant 0 : index
    %3 = vector.load %arg2[%c0_3, %c0_4] : memref<512x128xbf16, #tpu.memory_space<vmem>>, vector<512x128xbf16>
    %c128 = arith.constant 128 : index
    %c0_5 = arith.constant 0 : index
    %4 = vector.load %arg3[%c128, %c0_5] : memref<256x128xbf16, #tpu.memory_space<vmem>>, vector<128x128xbf16>
    %cst_6 = arith.constant dense<0.000000e+00> : vector<512x128xf32>
    %5 = tpu.matmul %3, %4, %cst_6 {dimension_numbers = #tpu.dot_dimension_numbers<[1], [0], [0], [1], [0, 0, 1, 1], [], []>} : vector<512x128xbf16>, vector<128x128xbf16>, vector<512x128xf32> -> vector<512x128xf32>
    %6 = arith.addf %2, %5 : vector<512x128xf32>
    %c0_7 = arith.constant 0 : index
    %c0_8 = arith.constant 0 : index
    %7 = vector.load %arg4[%c0_7, %c0_8] : memref<1x128xf32, #tpu.memory_space<vmem>>, vector<1x128xf32>
    %8 = vector.broadcast %7 : vector<1x128xf32> to vector<512x128xf32>
    %9 = arith.addf %6, %8 : vector<512x128xf32>
    %cst_9 = arith.constant 0.000000e+00 : f32
    %10 = vector.broadcast %cst_9 : f32 to vector<512x128xf32>
    %11 = arith.maximumf %9, %10 : vector<512x128xf32>
    %c0_10 = arith.constant 0 : index
    %c0_11 = arith.constant 0 : index
    %12 = vector.load %arg5[%c0_10, %c0_11] : memref<128x1xf32, #tpu.memory_space<vmem>>, vector<128x1xf32>
    %cst_12 = arith.constant dense<0.000000e+00> : vector<512x1xf32>
    %13 = tpu.matmul %11, %12, %cst_12 {dimension_numbers = #tpu.dot_dimension_numbers<[1], [0], [0], [1], [0, 0, 1, 1], [], []>} : vector<512x128xf32>, vector<128x1xf32>, vector<512x1xf32> -> vector<512x1xf32>
    %c0_13 = arith.constant 0 : index
    %c0_14 = arith.constant 0 : index
    %14 = memref.load %arg6[%c0_13, %c0_14] : memref<1x1xf32, #tpu.memory_space<smem>>
    %15 = vector.broadcast %14 : f32 to vector<512x1xf32>
    %16 = arith.addf %13, %15 : vector<512x1xf32>
    %17 = arith.negf %16 : vector<512x1xf32>
    %18 = math.exp %17 : vector<512x1xf32>
    %cst_15 = arith.constant 1.000000e+00 : f32
    %19 = vector.broadcast %cst_15 : f32 to vector<512x1xf32>
    %20 = arith.addf %19, %18 : vector<512x1xf32>
    %21 = arith.divf %19, %20 : vector<512x1xf32>
    %c0_16 = arith.constant 0 : index
    %c0_17 = arith.constant 0 : index
    %22 = vector.load %arg7[%c0_16, %c0_17] : memref<512x1xf32, #tpu.memory_space<vmem>>, vector<512x1xf32>
    tpu.vector_store %arg7[%c0_16, %c0_17], %21 {strides = array<i32>} : memref<512x1xf32, #tpu.memory_space<vmem>>, vector<512x1xf32>,
    return
  }
  func.func @transform_0(%arg0: i32) -> (i32, i32) {
    %c0_i32 = arith.constant 0 : i32
    %c0_i32_0 = arith.constant 0 : i32
    return %arg0, %c0_i32 : i32, i32
  }
  func.func @transform_1(%arg0: i32) -> (i32, i32) {
    %c0_i32 = arith.constant 0 : i32
    %c0_i32_0 = arith.constant 0 : i32
    return %arg0, %c0_i32 : i32, i32
  }
  func.func @transform_2(%arg0: i32) -> (i32, i32) {
    %c0_i32 = arith.constant 0 : i32
    %c0_i32_0 = arith.constant 0 : i32
    %c0_i32_1 = arith.constant 0 : i32
    return %c0_i32, %c0_i32_0 : i32, i32
  }
  func.func @transform_3(%arg0: i32) -> (i32, i32) {
    %c0_i32 = arith.constant 0 : i32
    %c0_i32_0 = arith.constant 0 : i32
    %c0_i32_1 = arith.constant 0 : i32
    return %c0_i32, %c0_i32_0 : i32, i32
  }
  func.func @transform_4(%arg0: i32) -> (i32, i32) {
    %c0_i32 = arith.constant 0 : i32
    %c0_i32_0 = arith.constant 0 : i32
    %c0_i32_1 = arith.constant 0 : i32
    return %c0_i32, %c0_i32_0 : i32, i32
  }
  func.func @transform_5(%arg0: i32) -> (i32, i32) {
    %c0_i32 = arith.constant 0 : i32
    %c0_i32_0 = arith.constant 0 : i32
    %c0_i32_1 = arith.constant 0 : i32
    return %c0_i32, %c0_i32_0 : i32, i32
  }
  func.func @transform_6(%arg0: i32) -> (i32, i32) {
    %c0_i32 = arith.constant 0 : i32
    %c0_i32_0 = arith.constant 0 : i32
    return %arg0, %c0_i32 : i32, i32
  }
}

</mosaic_0001>

<llo_original>
// kernel: tpu_custom_call.1
$region0: #{tpu_custom_call.1}
  #allocation0 [shape = 'u32[]', space=smem, size = 0x4, offset = 0x4, fixed_abs, tag = 'smem constant byte address 0x4 - core index']
  #allocation1 [shape = 'u32[144,128]{1,0:T(1,128)}', space=vmem, size = 0x12000, scoped, tag = 'internal scratch']
  #allocation2 [shape = 'f32[1,1]{1,0:T(1,128)S(6)}', space=smem, size = 0x200, scoped, tag = 'scoped memory for tpu_custom_call.1']
  %s0 = inlined_call_operand.hbm [shape: bf16[1000,128], index: 0, kind: input, shape index: {}]
  %s1 = inlined_call_operand.hbm [shape: bf16[1000,128], index: 1, kind: input, shape index: {}]
  %s2 = inlined_call_operand.vmem [shape: bf16[256,128], index: 2, kind: input, shape index: {}]
  %s3 = inlined_call_operand.vmem [shape: f32[1,128], index: 3, kind: input, shape index: {}]
  %s4 = inlined_call_operand.vmem [shape: f32[128,1], index: 4, kind: input, shape index: {}]
  %s5 = inlined_call_operand.<no memory space> [shape: f32[1,1], index: 5, kind: input, shape index: {}]
  %s6 = inlined_call_operand.vmem [shape: f32[1000,1], index: 6, kind: output, shape index: {}]
  %s7 = sld [smem:[#allocation0]]
  $region113: #{tpu_custom_call.1} parent=0
    _
  %s9 = ssub.s32 1, %s7
  %s10 = scalar_select 0, %s9, %s7
  %11 = sst [smem:[#allocation2]] %s5
  $region1: #{tpu_custom_call.1} parent=0
    #allocation3 [shape = 'u8[262144]{0}', space=vmem, size = 0x40000, scoped, tag = 'input window, operand 0']
    #allocation4 [shape = 's32[2]{0}', space=sflag, size = 0x8, scoped, tag = 'scoped memory for tpu_custom_call.1']
    #allocation5 [shape = 'u8[262144]{0}', space=vmem, size = 0x40000, scoped, tag = 'input window, operand 1']
    #allocation6 [shape = 's32[2]{0}', space=sflag, size = 0x8, scoped, tag = 'scoped memory for tpu_custom_call.1']
    #allocation7 [shape = 'u8[524288]{0}', space=vmem, size = 0x80000, scoped, tag = 'output window, operand 0']
    %12 = vsyncpa [#allocation4], 0
    %s13 = scalar_lea.sflag [#allocation4], 1
    %14 = vsyncpa %s13, 0
    %15 = vsyncpa [#allocation6], 0
    %s16 = scalar_lea.sflag [#allocation6], 1
    %17 = vsyncpa %s16, 0
    loop: start=0, step=1, limit=4
    $region2: #{tpu_custom_call.1} parent=1 // loop_pre_header
      _
    $region3: #{tpu_custom_call.1} parent=1 // loop_header
      %s19 = sphi 0, %s23
      %p20 = scmp.ge.s32.totalorder %s19, 4
      %s29 = sphi 0, %s31
      %s32 = sphi 0, %s29
      %s33 = sphi 0, %s32
      %s49 = sphi 0, %s33
      %s55 = sphi 0, %s57
      %s58 = sphi 0, %s55
      %s59 = sphi 0, %s58
      %s75 = sphi 0, %s59
      %s79 = sphi 0, %s79
      %s81 = sphi 0, %s79
      %s82 = sphi 0, %s81
      %s96 = sphi 0, %s82
      %s100 = sphi 0, %s100
      %s102 = sphi 0, %s100
      %s103 = sphi 0, %s102
      %s117 = sphi 0, %s103
      %s121 = sphi 0, %s121
      %s123 = sphi 0, %s121
      %s124 = sphi 0, %s123
      %s138 = sphi 0, %s124
      %s142 = sphi 0, %s142
      %s144 = sphi 0, %s142
      %s145 = sphi 0, %s144
      %s159 = sphi 0, %s145
      %s165 = sphi 0, %s167
      %s168 = sphi 0, %s165
      %s169 = sphi 0, %s168
      %s185 = sphi 0, %s169
    $region4: #{tpu_custom_call.1} parent=1 // loop_header_branch
      %22 = sbr.rel (%p20) target = $region8
    $region5: #{tpu_custom_call.1} parent=1 // loop_body
      %s24 = ssub.s32 %s19, 1
      %s25 = ssub.s32 %s19, 2
      %s26 = sadd.s32 %s19, 1
      %s27 = ssub.s32 %s19, %s26
      %p28 = scmp.eq.s32.totalorder %s27, 0
      %s30 = sadd.s32 %s29, 1
      %s31 = scalar_select %p28, %s29, %s30
      %p34 = pneg %p28
      %p35 = scmp.eq.s32.totalorder %s19, 1
      %p36 = por %p34, %p35
      %p37 = scmp.ne.s32.totalorder %s29, %s32
      %p38 = scmp.eq.s32.totalorder %s19, 0
      %p39 = por %p37, %p38
      %p40 = scmp.ne.s32.totalorder %s29, %s32
      %p41 = scmp.eq.s32.totalorder %s24, 1
      %p42 = por %p40, %p41
      %p43 = scmp.ne.s32.totalorder %s32, %s33
      %p44 = scmp.eq.s32.totalorder %s24, 0
      %p45 = por %p43, %p44
      %p46 = scmp.ne.s32.totalorder %s32, %s33
      %p47 = scmp.eq.s32.totalorder %s25, 1
      %p48 = por %p46, %p47
      %p50 = scmp.ne.s32.totalorder %s33, %s49
      %p51 = scmp.eq.s32.totalorder %s25, 0
      %p52 = por %p50, %p51
      %s53 = ssub.s32 %s19, %s26
      %p54 = scmp.eq.s32.totalorder %s53, 0
      %s56 = sadd.s32 %s55, 1
      %s57 = scalar_select %p54, %s55, %s56
      %p60 = pneg %p54
      %p61 = scmp.eq.s32.totalorder %s19, 1
      %p62 = por %p60, %p61
      %p63 = scmp.ne.s32.totalorder %s55, %s58
      %p64 = scmp.eq.s32.totalorder %s19, 0
      %p65 = por %p63, %p64
      %p66 = scmp.ne.s32.totalorder %s55, %s58
      %p67 = scmp.eq.s32.totalorder %s24, 1
      %p68 = por %p66, %p67
      %p69 = scmp.ne.s32.totalorder %s58, %s59
      %p70 = scmp.eq.s32.totalorder %s24, 0
      %p71 = por %p69, %p70
      %p72 = scmp.ne.s32.totalorder %s58, %s59
      %p73 = scmp.eq.s32.totalorder %s25, 1
      %p74 = por %p72, %p73
      %p76 = scmp.ne.s32.totalorder %s59, %s75
      %p77 = scmp.eq.s32.totalorder %s25, 0
      %p78 = por %p76, %p77
      %s80 = sadd.s32 %s79, 1
      %p83 = scmp.eq.s32.totalorder %s19, 1
      %p84 = scmp.ne.s32.totalorder %s79, %s81
      %p85 = scmp.eq.s32.totalorder %s19, 0
      %p86 = por %p84, %p85
      %p87 = scmp.ne.s32.totalorder %s79, %s81
      %p88 = scmp.eq.s32.totalorder %s24, 1
      %p89 = por %p87, %p88
      %p90 = scmp.ne.s32.totalorder %s81, %s82
      %p91 = scmp.eq.s32.totalorder %s24, 0
      %p92 = por %p90, %p91
      %p93 = scmp.ne.s32.totalorder %s81, %s82
      %p94 = scmp.eq.s32.totalorder %s25, 1
      %p95 = por %p93, %p94
      %p97 = scmp.ne.s32.totalorder %s82, %s96
      %p98 = scmp.eq.s32.totalorder %s25, 0
      %p99 = por %p97, %p98
      %s101 = sadd.s32 %s100, 1
      %p104 = scmp.eq.s32.totalorder %s19, 1
      %p105 = scmp.ne.s32.totalorder %s100, %s102
      %p106 = scmp.eq.s32.totalorder %s19, 0
      %p107 = por %p105, %p106
      %p108 = scmp.ne.s32.totalorder %s100, %s102
      %p109 = scmp.eq.s32.totalorder %s24, 1
      %p110 = por %p108, %p109
      %p111 = scmp.ne.s32.totalorder %s102, %s103
      %p112 = scmp.eq.s32.totalorder %s24, 0
      %p113 = por %p111, %p112
      %p114 = scmp.ne.s32.totalorder %s102, %s103
      %p115 = scmp.eq.s32.totalorder %s25, 1
      %p116 = por %p114, %p115
      %p118 = scmp.ne.s32.totalorder %s103, %s117
      %p119 = scmp.eq.s32.totalorder %s25, 0
      %p120 = por %p118, %p119
      %s122 = sadd.s32 %s121, 1
      %p125 = scmp.eq.s32.totalorder %s19, 1
      %p126 = scmp.ne.s32.totalorder %s121, %s123
      %p127 = scmp.eq.s32.totalorder %s19, 0
      %p128 = por %p126, %p127
      %p129 = scmp.ne.s32.totalorder %s121, %s123
      %p130 = scmp.eq.s32.totalorder %s24, 1
      %p131 = por %p129, %p130
      %p132 = scmp.ne.s32.totalorder %s123, %s124
      %p133 = scmp.eq.s32.totalorder %s24, 0
      %p134 = por %p132, %p133
      %p135 = scmp.ne.s32.totalorder %s123, %s124
      %p136 = scmp.eq.s32.totalorder %s25, 1
      %p137 = por %p135, %p136
      %p139 = scmp.ne.s32.totalorder %s124, %s138
      %p140 = scmp.eq.s32.totalorder %s25, 0
      %p141 = por %p139, %p140
      %s143 = sadd.s32 %s142, 1
      %p146 = scmp.eq.s32.totalorder %s19, 1
      %p147 = scmp.ne.s32.totalorder %s142, %s144
      %p148 = scmp.eq.s32.totalorder %s19, 0
      %p149 = por %p147, %p148
      %p150 = scmp.ne.s32.totalorder %s142, %s144
      %p151 = scmp.eq.s32.totalorder %s24, 1
      %p152 = por %p150, %p151
      %p153 = scmp.ne.s32.totalorder %s144, %s145
      %p154 = scmp.eq.s32.totalorder %s24, 0
      %p155 = por %p153, %p154
      %p156 = scmp.ne.s32.totalorder %s144, %s145
      %p157 = scmp.eq.s32.totalorder %s25, 1
      %p158 = por %p156, %p157
      %p160 = scmp.ne.s32.totalorder %s145, %s159
      %p161 = scmp.eq.s32.totalorder %s25, 0
      %p162 = por %p160, %p161
      %s163 = ssub.s32 %s19, %s26
      %p164 = scmp.eq.s32.totalorder %s163, 0
      %s166 = sadd.s32 %s165, 1
      %s167 = scalar_select %p164, %s165, %s166
      %p170 = pneg %p164
      %p171 = scmp.eq.s32.totalorder %s19, 1
      %p172 = por %p170, %p171
      %p173 = scmp.ne.s32.totalorder %s165, %s168
      %p174 = scmp.eq.s32.totalorder %s19, 0
      %p175 = por %p173, %p174
      %p176 = scmp.ne.s32.totalorder %s165, %s168
      %p177 = scmp.eq.s32.totalorder %s24, 1
      %p178 = por %p176, %p177
      %p179 = scmp.ne.s32.totalorder %s168, %s169
      %p180 = scmp.eq.s32.totalorder %s24, 0
      %p181 = por %p179, %p180
      %p182 = scmp.ne.s32.totalorder %s168, %s169
      %p183 = scmp.eq.s32.totalorder %s25, 1
      %p184 = por %p182, %p183
      %p186 = scmp.ne.s32.totalorder %s169, %s185
      %p187 = scmp.eq.s32.totalorder %s25, 0
      %p188 = por %p186, %p187
      %p189 = scmp.le.s32.totalorder 1, %s19
      %p190 = scmp.lt.s32.totalorder %s19, 3
      %p191 = pnand %p189, %p190
      %p192 = pneg %p191
      // Predicated region
      $region9: #{tpu_custom_call.1} parent=5 // pred_check
        _
      $region10: #{tpu_custom_call.1} parent=5 // pred_check_branch
        %194 = sbr.rel (%p191) target = $region12
      $region11: #{tpu_custom_call.1} parent=5 // pred_region
        %s195 = ssub.s32 %s19, 1
        // Predicated region
        $region13: #{tpu_custom_call.1} parent=11 // pred_check
          %p196 = pneg %p92
        $region14: #{tpu_custom_call.1} parent=11 // pred_check_branch
          %198 = sbr.rel (%p196) target = $region16
        $region15: #{tpu_custom_call.1} parent=11 // pred_region
          _
        $region16: #{tpu_custom_call.1} parent=11 // pred_fallthru
          _
        // Predicated region
        $region17: #{tpu_custom_call.1} parent=11 // pred_check
          %p199 = pneg %p113
        $region18: #{tpu_custom_call.1} parent=11 // pred_check_branch
          %201 = sbr.rel (%p199) target = $region20
        $region19: #{tpu_custom_call.1} parent=11 // pred_region
          _
        $region20: #{tpu_custom_call.1} parent=11 // pred_fallthru
          _
        // Predicated region
        $region21: #{tpu_custom_call.1} parent=11 // pred_check
          %p202 = pneg %p134
        $region22: #{tpu_custom_call.1} parent=11 // pred_check_branch
          %204 = sbr.rel (%p202) target = $region24
        $region23: #{tpu_custom_call.1} parent=11 // pred_region
          _
        $region24: #{tpu_custom_call.1} parent=11 // pred_fallthru
          _
        // Predicated region
        $region25: #{tpu_custom_call.1} parent=11 // pred_check
          %p205 = pneg %p155
        $region26: #{tpu_custom_call.1} parent=11 // pred_check_branch
          %207 = sbr.rel (%p205) target = $region28
        $region27: #{tpu_custom_call.1} parent=11 // pred_region
          _
        $region28: #{tpu_custom_call.1} parent=11 // pred_fallthru
          _
      $region12: #{tpu_custom_call.1} parent=5 // pred_fallthru
        _
      %p208 = scmp.lt.s32.totalorder %s19, 2
      // Predicated region
      $region29: #{tpu_custom_call.1} parent=5 // pred_check
        %p209 = pneg %p208
      $region30: #{tpu_custom_call.1} parent=5 // pred_check_branch
        %211 = sbr.rel (%p209) target = $region32
      $region31: #{tpu_custom_call.1} parent=5 // pred_region
        // Predicated region
        $region33: #{tpu_custom_call.1} parent=31 // pred_check
          %p212 = pneg %p39
        $region34: #{tpu_custom_call.1} parent=31 // pred_check_branch
          %214 = sbr.rel (%p212) target = $region36
        $region35: #{tpu_custom_call.1} parent=31 // pred_region
          %s215 = sand.u32 %s29, 1
          %s216 = scalar_lea.sflag [#allocation4], %s215
          %s217 = sand.u32 %s29, 1
          %s218 = smul.addr %s217, 256
          %s219 = scalar_lea.vmem [#allocation3], %s218
          %s220 = smul.u32 64, %s19
          %s221 = ssub.s32 125, %s220
          %p222 = scmp.lt.s32.totalorder %s221, 64
          %s223 = scalar_select %p222, %s221, 64
          %s224 = smul.u32 64, %s223
          %s226 = ssub.s32 4096, %s224
          %227 = vsyncadd %s216, %s226
          %p228 = scmp.ne.s32.totalorder 0, %s224
          %s229 = smul.addr %s220, 64
          %s230 = scalar_lea.hbm %s0, %s229
          %s231 = smul.u32 4, %s223
          %s232 = sshll.u32 %s219, 4
          %s233 = int_to_ptr.vmem [resolvable:$true] %s232
          %s234 = sshll.u32 %s231, 4
          %238 = dma.hbm_to_vmem [thread:$0]  (%p228), %s230, %s234, %s233, %s216, 64, 64, 4
        $region36: #{tpu_custom_call.1} parent=31 // pred_fallthru
          _
        // Predicated region
        $region37: #{tpu_custom_call.1} parent=31 // pred_check
          %p239 = pneg %p65
        $region38: #{tpu_custom_call.1} parent=31 // pred_check_branch
          %241 = sbr.rel (%p239) target = $region40
        $region39: #{tpu_custom_call.1} parent=31 // pred_region
          %s242 = sand.u32 %s55, 1
          %s243 = scalar_lea.sflag [#allocation6], %s242
          %s244 = sand.u32 %s55, 1
          %s245 = smul.addr %s244, 256
          %s246 = scalar_lea.vmem [#allocation5], %s245
          %s247 = smul.u32 64, %s19
          %s248 = ssub.s32 125, %s247
          %p249 = scmp.lt.s32.totalorder %s248, 64
          %s250 = scalar_select %p249, %s248, 64
          %s251 = smul.u32 64, %s250
          %s253 = ssub.s32 4096, %s251
          %254 = vsyncadd %s243, %s253
          %p255 = scmp.ne.s32.totalorder 0, %s251
          %s256 = smul.addr %s247, 64
          %s257 = scalar_lea.hbm %s1, %s256
          %s258 = smul.u32 4, %s250
          %s259 = sshll.u32 %s246, 4
          %s260 = int_to_ptr.vmem [resolvable:$true] %s259
          %s261 = sshll.u32 %s258, 4
          %265 = dma.hbm_to_vmem [thread:$0]  (%p255), %s257, %s261, %s260, %s243, 64, 64, 4
        $region40: #{tpu_custom_call.1} parent=31 // pred_fallthru
          _
      $region32: #{tpu_custom_call.1} parent=5 // pred_fallthru
        _
      %p266 = scmp.le.s32.totalorder 1, %s19
      %p267 = scmp.lt.s32.totalorder %s19, 3
      %p268 = pnand %p266, %p267
      %p269 = pneg %p268
      // Predicated region
      $region41: #{tpu_custom_call.1} parent=5 // pred_check
        _
      $region42: #{tpu_custom_call.1} parent=5 // pred_check_branch
        %271 = sbr.rel (%p268) target = $region44
      $region43: #{tpu_custom_call.1} parent=5 // pred_region
        %s272 = ssub.s32 %s19, 1
        %s273 = sand.u32 %s32, 1
        %s274 = scalar_lea.sflag [#allocation4], %s273
        %s275 = sand.u32 %s32, 1
        %s276 = smul.addr %s275, 256
        %s277 = scalar_lea.vmem [#allocation3], %s276
        // Predicated region
        $region45: #{tpu_custom_call.1} parent=43 // pred_check
          %p278 = pneg %p45
        $region46: #{tpu_custom_call.1} parent=43 // pred_check_branch
          %280 = sbr.rel (%p278) target = $region48
        $region47: #{tpu_custom_call.1} parent=43 // pred_region
          %281 = dma.done %s274, 4096
        $region48: #{tpu_custom_call.1} parent=43 // pred_fallthru
          _
        %s282 = sand.u32 %s58, 1
        %s283 = scalar_lea.sflag [#allocation6], %s282
        %s284 = sand.u32 %s58, 1
        %s285 = smul.addr %s284, 256
        %s286 = scalar_lea.vmem [#allocation5], %s285
        // Predicated region
        $region49: #{tpu_custom_call.1} parent=43 // pred_check
          %p287 = pneg %p71
        $region50: #{tpu_custom_call.1} parent=43 // pred_check_branch
          %289 = sbr.rel (%p287) target = $region52
        $region51: #{tpu_custom_call.1} parent=43 // pred_region
          %290 = dma.done %s283, 4096
        $region52: #{tpu_custom_call.1} parent=43 // pred_fallthru
          _
        %s291 = sand.u32 %s32, 1
        %s292 = scalar_lea.sflag [#allocation4], %s291
        %s293 = sand.u32 %s32, 1
        %s294 = smul.addr %s293, 256
        %s295 = scalar_lea.vmem [#allocation3], %s294
        %p296 = pneg %p45
        %p297 = pneg %p42
        %s298 = sand.u32 %s58, 1
        %s299 = scalar_lea.sflag [#allocation6], %s298
        %s300 = sand.u32 %s58, 1
        %s301 = smul.addr %s300, 256
        %s302 = scalar_lea.vmem [#allocation5], %s301
        %p303 = pneg %p71
        %p304 = pneg %p68
        %p305 = pneg %p92
        %p306 = pneg %p89
        %p307 = pneg %p113
        %p308 = pneg %p110
        %p309 = pneg %p134
        %p310 = pneg %p131
        %p311 = pneg %p155
        %p312 = pneg %p152
        %p313 = pneg %p181
        %p314 = pneg %p178
        %s315 = sand.u32 %s168, 1
        %s316 = sand.u32 %s168, 1
        %s317 = smul.addr %s316, 512
        %s318 = scalar_lea.vmem [#allocation7], %s317
        %s319 = smul.u32 64, %s24
        %s320 = ssub.s32 125, %s319
        %p321 = scmp.lt.s32.totalorder %s320, 64
        %s322 = scalar_select %p321, %s320, 64
        %s323 = smul.u32 64, %s322
        %s324 = smul.u32 64, %s24
        %s325 = ssub.s32 125, %s324
        %p326 = scmp.lt.s32.totalorder %s325, 64
        %s327 = scalar_select %p326, %s325, 64
        %s328 = smul.u32 64, %s327
        %s329 = smul.u32 64, %s24
        %s330 = ssub.s32 125, %s329
        %p331 = scmp.lt.s32.totalorder %s330, 64
        %s332 = scalar_select %p331, %s330, 64
        %s333 = smul.u32 128, %s332
        %v335 = vld [vmem:[%s277] sm:$0xf]
        %v336 = vld [vmem:[%s277 + $0x4] sm:$0xf]
        %v337 = vld [vmem:[%s277 + $0x8] sm:$0xf]
        %v338 = vld [vmem:[%s277 + $0xc] sm:$0xf]
        %v339 = vld [vmem:[%s277 + $0x10] sm:$0xf]
        %v340 = vld [vmem:[%s277 + $0x14] sm:$0xf]
        %v341 = vld [vmem:[%s277 + $0x18] sm:$0xf]
        %v342 = vld [vmem:[%s277 + $0x1c] sm:$0xf]
        %v343 = vld [vmem:[%s277 + $0x20] sm:$0xf]
        %v344 = vld [vmem:[%s277 + $0x24] sm:$0xf]
        %v345 = vld [vmem:[%s277 + $0x28] sm:$0xf]
        %v346 = vld [vmem:[%s277 + $0x2c] sm:$0xf]
        %v347 = vld [vmem:[%s277 + $0x30] sm:$0xf]
        %v348 = vld [vmem:[%s277 + $0x34] sm:$0xf]
        %v349 = vld [vmem:[%s277 + $0x38] sm:$0xf]
        %v350 = vld [vmem:[%s277 + $0x3c] sm:$0xf]
        %v351 = vld [vmem:[%s277 + $0x40] sm:$0xf]
        %v352 = vld [vmem:[%s277 + $0x44] sm:$0xf]
        %v353 = vld [vmem:[%s277 + $0x48] sm:$0xf]
        %v354 = vld [vmem:[%s277 + $0x4c] sm:$0xf]
        %v355 = vld [vmem:[%s277 + $0x50] sm:$0xf]
        %v356 = vld [vmem:[%s277 + $0x54] sm:$0xf]
        %v357 = vld [vmem:[%s277 + $0x58] sm:$0xf]
        %v358 = vld [vmem:[%s277 + $0x5c] sm:$0xf]
        %v359 = vld [vmem:[%s277 + $0x60] sm:$0xf]
        %v360 = vld [vmem:[%s277 + $0x64] sm:$0xf]
        %v361 = vld [vmem:[%s277 + $0x68] sm:$0xf]
        %v362 = vld [vmem:[%s277 + $0x6c] sm:$0xf]
        %v363 = vld [vmem:[%s277 + $0x70] sm:$0xf]
        %v364 = vld [vmem:[%s277 + $0x74] sm:$0xf]
        %v365 = vld [vmem:[%s277 + $0x78] sm:$0xf]
        %v366 = vld [vmem:[%s277 + $0x7c] sm:$0xf]
        %v367 = vld [vmem:[%s277 + $0x80] sm:$0xf]
        %v368 = vld [vmem:[%s277 + $0x84] sm:$0xf]
        %v369 = vld [vmem:[%s277 + $0x88] sm:$0xf]
        %v370 = vld [vmem:[%s277 + $0x8c] sm:$0xf]
        %v371 = vld [vmem:[%s277 + $0x90] sm:$0xf]
        %v372 = vld [vmem:[%s277 + $0x94] sm:$0xf]
        %v373 = vld [vmem:[%s277 + $0x98] sm:$0xf]
        %v374 = vld [vmem:[%s277 + $0x9c] sm:$0xf]
        %v375 = vld [vmem:[%s277 + $0xa0] sm:$0xf]
        %v376 = vld [vmem:[%s277 + $0xa4] sm:$0xf]
        %v377 = vld [vmem:[%s277 + $0xa8] sm:$0xf]
        %v378 = vld [vmem:[%s277 + $0xac] sm:$0xf]
        %v379 = vld [vmem:[%s277 + $0xb0] sm:$0xf]
        %v380 = vld [vmem:[%s277 + $0xb4] sm:$0xf]
        %v381 = vld [vmem:[%s277 + $0xb8] sm:$0xf]
        %v382 = vld [vmem:[%s277 + $0xbc] sm:$0xf]
        %v383 = vld [vmem:[%s277 + $0xc0] sm:$0xf]
        %v384 = vld [vmem:[%s277 + $0xc4] sm:$0xf]
        %v385 = vld [vmem:[%s277 + $0xc8] sm:$0xf]
        %v386 = vld [vmem:[%s277 + $0xcc] sm:$0xf]
        %v387 = vld [vmem:[%s277 + $0xd0] sm:$0xf]
        %v388 = vld [vmem:[%s277 + $0xd4] sm:$0xf]
        %v389 = vld [vmem:[%s277 + $0xd8] sm:$0xf]
        %v390 = vld [vmem:[%s277 + $0xdc] sm:$0xf]
        %v391 = vld [vmem:[%s277 + $0xe0] sm:$0xf]
        %v392 = vld [vmem:[%s277 + $0xe4] sm:$0xf]
        %v393 = vld [vmem:[%s277 + $0xe8] sm:$0xf]
        %v394 = vld [vmem:[%s277 + $0xec] sm:$0xf]
        %v395 = vld [vmem:[%s277 + $0xf0] sm:$0xf]
        %v396 = vld [vmem:[%s277 + $0xf4] sm:$0xf]
        %v397 = vld [vmem:[%s277 + $0xf8] sm:$0xf]
        %v398 = vld [vmem:[%s277 + $0xfc] sm:$0xf]
        %v399 = vld [vmem:[%s2] sm:$0xf]
        %v400 = vld [vmem:[%s2 + $0x4] sm:$0xf]
        %v401 = vld [vmem:[%s2 + $0x8] sm:$0xf]
        %v402 = vld [vmem:[%s2 + $0xc] sm:$0xf]
        %v403 = vld [vmem:[%s2 + $0x10] sm:$0xf]
        %v404 = vld [vmem:[%s2 + $0x14] sm:$0xf]
        %v405 = vld [vmem:[%s2 + $0x18] sm:$0xf]
        %v406 = vld [vmem:[%s2 + $0x1c] sm:$0xf]
        %v407 = vld [vmem:[%s2 + $0x20] sm:$0xf]
        %v408 = vld [vmem:[%s2 + $0x24] sm:$0xf]
        %v409 = vld [vmem:[%s2 + $0x28] sm:$0xf]
        %v410 = vld [vmem:[%s2 + $0x2c] sm:$0xf]
        %v411 = vld [vmem:[%s2 + $0x30] sm:$0xf]
        %v412 = vld [vmem:[%s2 + $0x34] sm:$0xf]
        %v413 = vld [vmem:[%s2 + $0x38] sm:$0xf]
        %v414 = vld [vmem:[%s2 + $0x3c] sm:$0xf]
        %v415 = vld [vmem:[%s286] sm:$0xf]
        %v416 = vld [vmem:[%s286 + $0x4] sm:$0xf]
        %v417 = vld [vmem:[%s286 + $0x8] sm:$0xf]
        %v418 = vld [vmem:[%s286 + $0xc] sm:$0xf]
        %v419 = vld [vmem:[%s286 + $0x10] sm:$0xf]
        %v420 = vld [vmem:[%s286 + $0x14] sm:$0xf]
        %v421 = vld [vmem:[%s286 + $0x18] sm:$0xf]
        %v422 = vld [vmem:[%s286 + $0x1c] sm:$0xf]
        %v423 = vld [vmem:[%s286 + $0x20] sm:$0xf]
        %v424 = vld [vmem:[%s286 + $0x24] sm:$0xf]
        %v425 = vld [vmem:[%s286 + $0x28] sm:$0xf]
        %v426 = vld [vmem:[%s286 + $0x2c] sm:$0xf]
        %v427 = vld [vmem:[%s286 + $0x30] sm:$0xf]
        %v428 = vld [vmem:[%s286 + $0x34] sm:$0xf]
        %v429 = vld [vmem:[%s286 + $0x38] sm:$0xf]
        %v430 = vld [vmem:[%s286 + $0x3c] sm:$0xf]
        %v431 = vld [vmem:[%s286 + $0x40] sm:$0xf]
        %v432 = vld [vmem:[%s286 + $0x44] sm:$0xf]
        %v433 = vld [vmem:[%s286 + $0x48] sm:$0xf]
        %v434 = vld [vmem:[%s286 + $0x4c] sm:$0xf]
        %v435 = vld [vmem:[%s286 + $0x50] sm:$0xf]
        %v436 = vld [vmem:[%s286 + $0x54] sm:$0xf]
        %v437 = vld [vmem:[%s286 + $0x58] sm:$0xf]
        %v438 = vld [vmem:[%s286 + $0x5c] sm:$0xf]
        %v439 = vld [vmem:[%s286 + $0x60] sm:$0xf]
        %v440 = vld [vmem:[%s286 + $0x64] sm:$0xf]
        %v441 = vld [vmem:[%s286 + $0x68] sm:$0xf]
        %v442 = vld [vmem:[%s286 + $0x6c] sm:$0xf]
        %v443 = vld [vmem:[%s286 + $0x70] sm:$0xf]
        %v444 = vld [vmem:[%s286 + $0x74] sm:$0xf]
        %v445 = vld [vmem:[%s286 + $0x78] sm:$0xf]
        %v446 = vld [vmem:[%s286 + $0x7c] sm:$0xf]
        %v447 = vld [vmem:[%s286 + $0x80] sm:$0xf]
        %v448 = vld [vmem:[%s286 + $0x84] sm:$0xf]
        %v449 = vld [vmem:[%s286 + $0x88] sm:$0xf]
        %v450 = vld [vmem:[%s286 + $0x8c] sm:$0xf]
        %v451 = vld [vmem:[%s286 + $0x90] sm:$0xf]
        %v452 = vld [vmem:[%s286 + $0x94] sm:$0xf]
        %v453 = vld [vmem:[%s286 + $0x98] sm:$0xf]
        %v454 = vld [vmem:[%s286 + $0x9c] sm:$0xf]
        %v455 = vld [vmem:[%s286 + $0xa0] sm:$0xf]
        %v456 = vld [vmem:[%s286 + $0xa4] sm:$0xf]
        %v457 = vld [vmem:[%s286 + $0xa8] sm:$0xf]
        %v458 = vld [vmem:[%s286 + $0xac] sm:$0xf]
        %v459 = vld [vmem:[%s286 + $0xb0] sm:$0xf]
        %v460 = vld [vmem:[%s286 + $0xb4] sm:$0xf]
        %v461 = vld [vmem:[%s286 + $0xb8] sm:$0xf]
        %v462 = vld [vmem:[%s286 + $0xbc] sm:$0xf]
        %v463 = vld [vmem:[%s286 + $0xc0] sm:$0xf]
        %v464 = vld [vmem:[%s286 + $0xc4] sm:$0xf]
        %v465 = vld [vmem:[%s286 + $0xc8] sm:$0xf]
        %v466 = vld [vmem:[%s286 + $0xcc] sm:$0xf]
        %v467 = vld [vmem:[%s286 + $0xd0] sm:$0xf]
        %v468 = vld [vmem:[%s286 + $0xd4] sm:$0xf]
        %v469 = vld [vmem:[%s286 + $0xd8] sm:$0xf]
        %v470 = vld [vmem:[%s286 + $0xdc] sm:$0xf]
        %v471 = vld [vmem:[%s286 + $0xe0] sm:$0xf]
        %v472 = vld [vmem:[%s286 + $0xe4] sm:$0xf]
        %v473 = vld [vmem:[%s286 + $0xe8] sm:$0xf]
        %v474 = vld [vmem:[%s286 + $0xec] sm:$0xf]
        %v475 = vld [vmem:[%s286 + $0xf0] sm:$0xf]
        %v476 = vld [vmem:[%s286 + $0xf4] sm:$0xf]
        %v477 = vld [vmem:[%s286 + $0xf8] sm:$0xf]
        %v478 = vld [vmem:[%s286 + $0xfc] sm:$0xf]
        %v479 = vld [vmem:[%s2 + $0x40] sm:$0xf]
        %v480 = vld [vmem:[%s2 + $0x44] sm:$0xf]
        %v481 = vld [vmem:[%s2 + $0x48] sm:$0xf]
        %v482 = vld [vmem:[%s2 + $0x4c] sm:$0xf]
        %v483 = vld [vmem:[%s2 + $0x50] sm:$0xf]
        %v484 = vld [vmem:[%s2 + $0x54] sm:$0xf]
        %v485 = vld [vmem:[%s2 + $0x58] sm:$0xf]
        %v486 = vld [vmem:[%s2 + $0x5c] sm:$0xf]
        %v487 = vld [vmem:[%s2 + $0x60] sm:$0xf]
        %v488 = vld [vmem:[%s2 + $0x64] sm:$0xf]
        %v489 = vld [vmem:[%s2 + $0x68] sm:$0xf]
        %v490 = vld [vmem:[%s2 + $0x6c] sm:$0xf]
        %v491 = vld [vmem:[%s2 + $0x70] sm:$0xf]
        %v492 = vld [vmem:[%s2 + $0x74] sm:$0xf]
        %v493 = vld [vmem:[%s2 + $0x78] sm:$0xf]
        %v494 = vld [vmem:[%s2 + $0x7c] sm:$0xf]
        %v559 = vunpack.c.l.b16 %v415
        %v560 = vunpack.c.l.b16 %v416
        %v561 = vunpack.c.l.b16 %v417
        %v562 = vunpack.c.l.b16 %v418
        %v563 = vunpack.c.l.b16 %v419
        %v564 = vunpack.c.l.b16 %v420
        %v565 = vunpack.c.l.b16 %v421
        %v566 = vunpack.c.l.b16 %v422
        %v567 = vunpack.c.l.b16 %v423
        %v568 = vunpack.c.l.b16 %v424
        %v569 = vunpack.c.l.b16 %v425
        %v570 = vunpack.c.l.b16 %v426
        %v571 = vunpack.c.l.b16 %v427
        %v572 = vunpack.c.l.b16 %v428
        %v573 = vunpack.c.l.b16 %v429
        %v574 = vunpack.c.l.b16 %v430
        %v575 = vunpack.c.l.b16 %v431
        %v576 = vunpack.c.l.b16 %v432
        %v577 = vunpack.c.l.b16 %v433
        %v578 = vunpack.c.l.b16 %v434
        %v579 = vunpack.c.l.b16 %v435
        %v580 = vunpack.c.l.b16 %v436
        %v581 = vunpack.c.l.b16 %v437
        %v582 = vunpack.c.l.b16 %v438
        %v583 = vunpack.c.l.b16 %v439
        %v584 = vunpack.c.l.b16 %v440
        %v585 = vunpack.c.l.b16 %v441
        %v586 = vunpack.c.l.b16 %v442
        %v587 = vunpack.c.l.b16 %v443
        %v588 = vunpack.c.l.b16 %v444
        %v589 = vunpack.c.l.b16 %v445
        %v590 = vunpack.c.l.b16 %v446
        %v591 = vunpack.c.l.b16 %v447
        %v592 = vunpack.c.l.b16 %v448
        %v593 = vunpack.c.l.b16 %v449
        %v594 = vunpack.c.l.b16 %v450
        %v595 = vunpack.c.l.b16 %v451
        %v596 = vunpack.c.l.b16 %v452
        %v597 = vunpack.c.l.b16 %v453
        %v598 = vunpack.c.l.b16 %v454
        %v599 = vunpack.c.l.b16 %v455
        %v600 = vunpack.c.l.b16 %v456
        %v601 = vunpack.c.l.b16 %v457
        %v602 = vunpack.c.l.b16 %v458
        %v603 = vunpack.c.l.b16 %v459
        %v604 = vunpack.c.l.b16 %v460
        %v605 = vunpack.c.l.b16 %v461
        %v606 = vunpack.c.l.b16 %v462
        %v607 = vunpack.c.l.b16 %v463
        %v608 = vunpack.c.l.b16 %v464
        %v609 = vunpack.c.l.b16 %v465
        %v610 = vunpack.c.l.b16 %v466
        %v611 = vunpack.c.l.b16 %v467
        %v612 = vunpack.c.l.b16 %v468
        %v613 = vunpack.c.l.b16 %v469
        %v614 = vunpack.c.l.b16 %v470
        %v615 = vunpack.c.l.b16 %v471
        %v616 = vunpack.c.l.b16 %v472
        %v617 = vunpack.c.l.b16 %v473
        %v618 = vunpack.c.l.b16 %v474
        %v619 = vunpack.c.l.b16 %v475
        %v620 = vunpack.c.l.b16 %v476
        %v621 = vunpack.c.l.b16 %v477
        %v622 = vunpack.c.l.b16 %v478
        %v623 = vpack.c.b16 %v560, %v559
        %v624 = vpack.c.b16 %v562, %v561
        %v625 = vpack.c.b16 %v564, %v563
        %v626 = vpack.c.b16 %v566, %v565
        %v627 = vpack.c.b16 %v568, %v567
        %v628 = vpack.c.b16 %v570, %v569
        %v629 = vpack.c.b16 %v572, %v571
        %v630 = vpack.c.b16 %v574, %v573
        %v631 = vpack.c.b16 %v576, %v575
        %v632 = vpack.c.b16 %v578, %v577
        %v633 = vpack.c.b16 %v580, %v579
        %v634 = vpack.c.b16 %v582, %v581
        %v635 = vpack.c.b16 %v584, %v583
        %v636 = vpack.c.b16 %v586, %v585
        %v637 = vpack.c.b16 %v588, %v587
        %v638 = vpack.c.b16 %v590, %v589
        %v639 = vpack.c.b16 %v592, %v591
        %v640 = vpack.c.b16 %v594, %v593
        %v641 = vpack.c.b16 %v596, %v595
        %v642 = vpack.c.b16 %v598, %v597
        %v643 = vpack.c.b16 %v600, %v599
        %v644 = vpack.c.b16 %v602, %v601
        %v645 = vpack.c.b16 %v604, %v603
        %v646 = vpack.c.b16 %v606, %v605
        %v647 = vpack.c.b16 %v608, %v607
        %v648 = vpack.c.b16 %v610, %v609
        %v649 = vpack.c.b16 %v612, %v611
        %v650 = vpack.c.b16 %v614, %v613
        %v651 = vpack.c.b16 %v616, %v615
        %v652 = vpack.c.b16 %v618, %v617
        %v653 = vpack.c.b16 %v620, %v619
        %v654 = vpack.c.b16 %v622, %v621
        %v703 = vunpack.c.l.b16 %v479
        %v704 = vunpack.c.l.b16 %v480
        %v705 = vunpack.c.l.b16 %v481
        %v706 = vunpack.c.l.b16 %v482
        %v707 = vunpack.c.l.b16 %v483
        %v708 = vunpack.c.l.b16 %v484
        %v709 = vunpack.c.l.b16 %v485
        %v710 = vunpack.c.l.b16 %v486
        %v711 = vunpack.c.l.b16 %v487
        %v712 = vunpack.c.l.b16 %v488
        %v713 = vunpack.c.l.b16 %v489
        %v714 = vunpack.c.l.b16 %v490
        %v715 = vunpack.c.l.b16 %v491
        %v716 = vunpack.c.l.b16 %v492
        %v717 = vunpack.c.l.b16 %v493
        %v718 = vunpack.c.l.b16 %v494
        %v719 = vpack.c.b16 %v704, %v703
        %v720 = vpack.c.b16 %v706, %v705
        %v721 = vpack.c.b16 %v708, %v707
        %v722 = vpack.c.b16 %v710, %v709
        %v723 = vpack.c.b16 %v712, %v711
        %v724 = vpack.c.b16 %v714, %v713
        %v725 = vpack.c.b16 %v716, %v715
        %v726 = vpack.c.b16 %v718, %v717
        %735 = vmatprep.subr.bf16.mxu0 0
        %736 = vmatpush1.bf16.msra.mxu0 %v719
        %737 = vmatprep.subr.bf16.mxu0 0
        %738 = vmatpush1.bf16.msra.mxu0 %v720
        %739 = vmatprep.subr.bf16.mxu0 0
        %740 = vmatpush1.bf16.msra.mxu0 %v721
        %741 = vmatprep.subr.bf16.mxu0 0
        %742 = vmatpush1.bf16.msra.mxu0 %v722
        %743 = vmatprep.subr.bf16.mxu0 0
        %744 = vmatpush1.bf16.msra.mxu0 %v723
        %745 = vmatprep.subr.bf16.mxu0 0
        %746 = vmatpush1.bf16.msra.mxu0 %v724
        %747 = vmatprep.subr.bf16.mxu0 0
        %748 = vmatpush1.bf16.msra.mxu0 %v725
        %749 = vmatprep.subr.bf16.mxu0 0
        %750 = vmatpush1.bf16.msra.mxu0 %v726
        %751 = vmatprep.subr.bf16.mxu0 0
        %752 = vmatpush1.bf16.msra.mxu0 0
        %753 = vmatprep.subr.bf16.mxu0 0
        %754 = vmatpush1.bf16.msra.mxu0 0
        %755 = vmatprep.subr.bf16.mxu0 0
        %756 = vmatpush1.bf16.msra.mxu0 0
        %757 = vmatprep.subr.bf16.mxu0 0
        %758 = vmatpush1.bf16.msra.mxu0 0
        %759 = vmatprep.subr.bf16.mxu0 0
        %760 = vmatpush1.bf16.msra.mxu0 0
        %761 = vmatprep.subr.bf16.mxu0 0
        %762 = vmatpush1.bf16.msra.mxu0 0
        %763 = vmatprep.subr.bf16.mxu0 0
        %764 = vmatpush1.bf16.msra.mxu0 0
        %765 = vmatprep.subr.bf16.mxu0 0
        %766 = vmatpush1.bf16.msra.mxu0 0
        %767 = vmatprep.mubr.bf16.mxu0 0
        %768 = vmatmul.mubr.bf16.gmra.mrb[0].mxu0 %v623
        %v769 = vpop.f32.mrb[0].mxu0
        %v770 = vadd.f32 0.0, %v769
        %v771 = vpop.f32.mrb[0].mxu0
        %v772 = vpop.f32.mrb[0].mxu0
        %v773 = vadd.f32 0.0, %v772
        %v774 = vpop.f32.mrb[0].mxu0
        %775 = vmatprep.mubr.bf16.mxu0 0
        %776 = vmatmul.mubr.bf16.gmra.mrb[0].mxu0 %v624
        %v777 = vpop.f32.mrb[0].mxu0
        %v778 = vadd.f32 0.0, %v777
        %v779 = vpop.f32.mrb[0].mxu0
        %v780 = vpop.f32.mrb[0].mxu0
        %v781 = vadd.f32 0.0, %v780
        %v782 = vpop.f32.mrb[0].mxu0
        %783 = vmatprep.mubr.bf16.mxu0 0
        %784 = vmatmul.mubr.bf16.gmra.mrb[0].mxu0 %v625
        %v785 = vpop.f32.mrb[0].mxu0
        %v786 = vadd.f32 0.0, %v785
        %v787 = vpop.f32.mrb[0].mxu0
        %v788 = vpop.f32.mrb[0].mxu0
        %v789 = vadd.f32 0.0, %v788
        %v790 = vpop.f32.mrb[0].mxu0
        %791 = vmatprep.mubr.bf16.mxu0 0
        %792 = vmatmul.mubr.bf16.gmra.mrb[0].mxu0 %v626
        %v793 = vpop.f32.mrb[0].mxu0
        %v794 = vadd.f32 0.0, %v793
        %v795 = vpop.f32.mrb[0].mxu0
        %v796 = vpop.f32.mrb[0].mxu0
        %v797 = vadd.f32 0.0, %v796
        %v798 = vpop.f32.mrb[0].mxu0
        %799 = vmatprep.mubr.bf16.mxu0 0
        %800 = vmatmul.mubr.bf16.gmra.mrb[0].mxu0 %v627
        %v801 = vpop.f32.mrb[0].mxu0
        %v802 = vadd.f32 0.0, %v801
        %v803 = vpop.f32.mrb[0].mxu0
        %v804 = vpop.f32.mrb[0].mxu0
        %v805 = vadd.f32 0.0, %v804
        %v806 = vpop.f32.mrb[0].mxu0
        %807 = vmatprep.mubr.bf16.mxu0 0
        %808 = vmatmul.mubr.bf16.gmra.mrb[0].mxu0 %v628
        %v809 = vpop.f32.mrb[0].mxu0
        %v810 = vadd.f32 0.0, %v809
        %v811 = vpop.f32.mrb[0].mxu0
        %v812 = vpop.f32.mrb[0].mxu0
        %v813 = vadd.f32 0.0, %v812
        %v814 = vpop.f32.mrb[0].mxu0
        %815 = vmatprep.mubr.bf16.mxu0 0
        %816 = vmatmul.mubr.bf16.gmra.mrb[0].mxu0 %v629
        %v817 = vpop.f32.mrb[0].mxu0
        %v818 = vadd.f32 0.0, %v817
        %v819 = vpop.f32.mrb[0].mxu0
        %v820 = vpop.f32.mrb[0].mxu0
        %v821 = vadd.f32 0.0, %v820
        %v822 = vpop.f32.mrb[0].mxu0
        %823 = vmatprep.mubr.bf16.mxu0 0
        %824 = vmatmul.mubr.bf16.gmra.mrb[0].mxu0 %v630
        %v825 = vpop.f32.mrb[0].mxu0
        %v826 = vadd.f32 0.0, %v825
        %v827 = vpop.f32.mrb[0].mxu0
        %v828 = vpop.f32.mrb[0].mxu0
        %v829 = vadd.f32 0.0, %v828
        %v830 = vpop.f32.mrb[0].mxu0
        %831 = vmatprep.mubr.bf16.mxu0 0
        %832 = vmatmul.mubr.bf16.gmra.mrb[0].mxu0 %v631
        %v833 = vpop.f32.mrb[0].mxu0
        %v834 = vadd.f32 0.0, %v833
        %v835 = vpop.f32.mrb[0].mxu0
        %v836 = vpop.f32.mrb[0].mxu0
        %v837 = vadd.f32 0.0, %v836
        %v838 = vpop.f32.mrb[0].mxu0
        %839 = vmatprep.mubr.bf16.mxu0 0
        %840 = vmatmul.mubr.bf16.gmra.mrb[0].mxu0 %v632
        %v841 = vpop.f32.mrb[0].mxu0
        %v842 = vadd.f32 0.0, %v841
        %v843 = vpop.f32.mrb[0].mxu0
        %v844 = vpop.f32.mrb[0].mxu0
        %v845 = vadd.f32 0.0, %v844
        %v846 = vpop.f32.mrb[0].mxu0
        %847 = vmatprep.mubr.bf16.mxu0 0
        %848 = vmatmul.mubr.bf16.gmra.mrb[0].mxu0 %v633
        %v849 = vpop.f32.mrb[0].mxu0
        %v850 = vadd.f32 0.0, %v849
        %v851 = vpop.f32.mrb[0].mxu0
        %v852 = vpop.f32.mrb[0].mxu0
        %v853 = vadd.f32 0.0, %v852
        %v854 = vpop.f32.mrb[0].mxu0
        %855 = vmatprep.mubr.bf16.mxu0 0
        %856 = vmatmul.mubr.bf16.gmra.mrb[0].mxu0 %v634
        %v857 = vpop.f32.mrb[0].mxu0
        %v858 = vadd.f32 0.0, %v857
        %v859 = vpop.f32.mrb[0].mxu0
        %v860 = vpop.f32.mrb[0].mxu0
        %v861 = vadd.f32 0.0, %v860
        %v862 = vpop.f32.mrb[0].mxu0
        %863 = vmatprep.mubr.bf16.mxu0 0
        %864 = vmatmul.mubr.bf16.gmra.mrb[0].mxu0 %v635
        %v865 = vpop.f32.mrb[0].mxu0
        %v866 = vadd.f32 0.0, %v865
        %v867 = vpop.f32.mrb[0].mxu0
        %v868 = vpop.f32.mrb[0].mxu0
        %v869 = vadd.f32 0.0, %v868
        %v870 = vpop.f32.mrb[0].mxu0
        %871 = vmatprep.mubr.bf16.mxu0 0
        %872 = vmatmul.mubr.bf16.gmra.mrb[0].mxu0 %v636
        %v873 = vpop.f32.mrb[0].mxu0
        %v874 = vadd.f32 0.0, %v873
        %v875 = vpop.f32.mrb[0].mxu0
        %v876 = vpop.f32.mrb[0].mxu0
        %v877 = vadd.f32 0.0, %v876
        %v878 = vpop.f32.mrb[0].mxu0
        %879 = vmatprep.mubr.bf16.mxu0 0
        %880 = vmatmul.mubr.bf16.gmra.mrb[0].mxu0 %v637
        %v881 = vpop.f32.mrb[0].mxu0
        %v882 = vadd.f32 0.0, %v881
        %v883 = vpop.f32.mrb[0].mxu0
        %v884 = vpop.f32.mrb[0].mxu0
        %v885 = vadd.f32 0.0, %v884
        %v886 = vpop.f32.mrb[0].mxu0
        %887 = vmatprep.mubr.bf16.mxu0 0
        %888 = vmatmul.mubr.bf16.gmra.mrb[0].mxu0 %v638
        %v889 = vpop.f32.mrb[0].mxu0
        %v890 = vadd.f32 0.0, %v889
        %v891 = vpop.f32.mrb[0].mxu0
        %v892 = vpop.f32.mrb[0].mxu0
        %v893 = vadd.f32 0.0, %v892
        %v894 = vpop.f32.mrb[0].mxu0
        %895 = vmatprep.mubr.bf16.mxu0 0
        %896 = vmatmul.mubr.bf16.gmra.mrb[0].mxu0 %v639
        %v897 = vpop.f32.mrb[0].mxu0
        %v898 = vadd.f32 0.0, %v897
        %v899 = vpop.f32.mrb[0].mxu0
        %v900 = vpop.f32.mrb[0].mxu0
        %v901 = vadd.f32 0.0, %v900
        %v902 = vpop.f32.mrb[0].mxu0
        %903 = vmatprep.mubr.bf16.mxu0 0
        %904 = vmatmul.mubr.bf16.gmra.mrb[0].mxu0 %v640
        %v905 = vpop.f32.mrb[0].mxu0
        %v906 = vadd.f32 0.0, %v905
        %v907 = vpop.f32.mrb[0].mxu0
        %v908 = vpop.f32.mrb[0].mxu0
        %v909 = vadd.f32 0.0, %v908
        %v910 = vpop.f32.mrb[0].mxu0
        %911 = vmatprep.mubr.bf16.mxu0 0
        %912 = vmatmul.mubr.bf16.gmra.mrb[0].mxu0 %v641
        %v913 = vpop.f32.mrb[0].mxu0
        %v914 = vadd.f32 0.0, %v913
        %v915 = vpop.f32.mrb[0].mxu0
        %v916 = vpop.f32.mrb[0].mxu0
        %v917 = vadd.f32 0.0, %v916
        %v918 = vpop.f32.mrb[0].mxu0
        %919 = vmatprep.mubr.bf16.mxu0 0
        %920 = vmatmul.mubr.bf16.gmra.mrb[0].mxu0 %v642
        %v921 = vpop.f32.mrb[0].mxu0
        %v922 = vadd.f32 0.0, %v921
        %v923 = vpop.f32.mrb[0].mxu0
        %v924 = vpop.f32.mrb[0].mxu0
        %v925 = vadd.f32 0.0, %v924
        %v926 = vpop.f32.mrb[0].mxu0
        %927 = vmatprep.mubr.bf16.mxu0 0
        %928 = vmatmul.mubr.bf16.gmra.mrb[0].mxu0 %v643
        %v929 = vpop.f32.mrb[0].mxu0
        %v930 = vadd.f32 0.0, %v929
        %v931 = vpop.f32.mrb[0].mxu0
        %v932 = vpop.f32.mrb[0].mxu0
        %v933 = vadd.f32 0.0, %v932
        %v934 = vpop.f32.mrb[0].mxu0
        %935 = vmatprep.mubr.bf16.mxu0 0
        %936 = vmatmul.mubr.bf16.gmra.mrb[0].mxu0 %v644
        %v937 = vpop.f32.mrb[0].mxu0
        %v938 = vadd.f32 0.0, %v937
        %v939 = vpop.f32.mrb[0].mxu0
        %v940 = vpop.f32.mrb[0].mxu0
        %v941 = vadd.f32 0.0, %v940
        %v942 = vpop.f32.mrb[0].mxu0
        %943 = vmatprep.mubr.bf16.mxu0 0
        %944 = vmatmul.mubr.bf16.gmra.mrb[0].mxu0 %v645
        %v945 = vpop.f32.mrb[0].mxu0
        %v946 = vadd.f32 0.0, %v945
        %v947 = vpop.f32.mrb[0].mxu0
        %v948 = vpop.f32.mrb[0].mxu0
        %v949 = vadd.f32 0.0, %v948
        %v950 = vpop.f32.mrb[0].mxu0
        %951 = vmatprep.mubr.bf16.mxu0 0
        %952 = vmatmul.mubr.bf16.gmra.mrb[0].mxu0 %v646
        %v953 = vpop.f32.mrb[0].mxu0
        %v954 = vadd.f32 0.0, %v953
        %v955 = vpop.f32.mrb[0].mxu0
        %v956 = vpop.f32.mrb[0].mxu0
        %v957 = vadd.f32 0.0, %v956
        %v958 = vpop.f32.mrb[0].mxu0
        %959 = vmatprep.mubr.bf16.mxu0 0
        %960 = vmatmul.mubr.bf16.gmra.mrb[0].mxu0 %v647
        %v961 = vpop.f32.mrb[0].mxu0
        %v962 = vadd.f32 0.0, %v961
        %v963 = vpop.f32.mrb[0].mxu0
        %v964 = vpop.f32.mrb[0].mxu0
        %v965 = vadd.f32 0.0, %v964
        %v966 = vpop.f32.mrb[0].mxu0
        %967 = vmatprep.mubr.bf16.mxu0 0
        %968 = vmatmul.mubr.bf16.gmra.mrb[0].mxu0 %v648
        %v969 = vpop.f32.mrb[0].mxu0
        %v970 = vadd.f32 0.0, %v969
        %v971 = vpop.f32.mrb[0].mxu0
        %v972 = vpop.f32.mrb[0].mxu0
        %v973 = vadd.f32 0.0, %v972
        %v974 = vpop.f32.mrb[0].mxu0
        %975 = vmatprep.mubr.bf16.mxu0 0
        %976 = vmatmul.mubr.bf16.gmra.mrb[0].mxu0 %v649
        %v977 = vpop.f32.mrb[0].mxu0
        %v978 = vadd.f32 0.0, %v977
        %v979 = vpop.f32.mrb[0].mxu0
        %v980 = vpop.f32.mrb[0].mxu0
        %v981 = vadd.f32 0.0, %v980
        %v982 = vpop.f32.mrb[0].mxu0
        %983 = vmatprep.mubr.bf16.mxu0 0
        %984 = vmatmul.mubr.bf16.gmra.mrb[0].mxu0 %v650
        %v985 = vpop.f32.mrb[0].mxu0
        %v986 = vadd.f32 0.0, %v985
        %v987 = vpop.f32.mrb[0].mxu0
        %v988 = vpop.f32.mrb[0].mxu0
        %v989 = vadd.f32 0.0, %v988
        %v990 = vpop.f32.mrb[0].mxu0
        %991 = vmatprep.mubr.bf16.mxu0 0
        %992 = vmatmul.mubr.bf16.gmra.mrb[0].mxu0 %v651
        %v993 = vpop.f32.mrb[0].mxu0
        %v994 = vadd.f32 0.0, %v993
        %v995 = vpop.f32.mrb[0].mxu0
        %v996 = vpop.f32.mrb[0].mxu0
        %v997 = vadd.f32 0.0, %v996
        %v998 = vpop.f32.mrb[0].mxu0
        %999 = vmatprep.mubr.bf16.mxu0 0
        %1000 = vmatmul.mubr.bf16.gmra.mrb[0].mxu0 %v652
        %v1001 = vpop.f32.mrb[0].mxu0
        %v1002 = vadd.f32 0.0, %v1001
        %v1003 = vpop.f32.mrb[0].mxu0
        %v1004 = vpop.f32.mrb[0].mxu0
        %v1005 = vadd.f32 0.0, %v1004
        %v1006 = vpop.f32.mrb[0].mxu0
        %1007 = vmatprep.mubr.bf16.mxu0 0
        %1008 = vmatmul.mubr.bf16.gmra.mrb[0].mxu0 %v653
        %v1009 = vpop.f32.mrb[0].mxu0
        %v1010 = vadd.f32 0.0, %v1009
        %v1011 = vpop.f32.mrb[0].mxu0
        %v1012 = vpop.f32.mrb[0].mxu0
        %v1013 = vadd.f32 0.0, %v1012
        %v1014 = vpop.f32.mrb[0].mxu0
        %1015 = vmatprep.mubr.bf16.mxu0 0
        %1016 = vmatmul.mubr.bf16.gmra.mrb[0].mxu0 %v654
        %v1017 = vpop.f32.mrb[0].mxu0
        %v1018 = vadd.f32 0.0, %v1017
        %v1019 = vpop.f32.mrb[0].mxu0
        %v1020 = vpop.f32.mrb[0].mxu0
        %v1021 = vadd.f32 0.0, %v1020
        %v1022 = vpop.f32.mrb[0].mxu0
        %1023 = vdwg.mxu0
        %v1088 = vunpack.c.l.b16 %v335
        %v1089 = vunpack.c.l.b16 %v336
        %v1090 = vunpack.c.l.b16 %v337
        %v1091 = vunpack.c.l.b16 %v338
        %v1092 = vunpack.c.l.b16 %v339
        %v1093 = vunpack.c.l.b16 %v340
        %v1094 = vunpack.c.l.b16 %v341
        %v1095 = vunpack.c.l.b16 %v342
        %v1096 = vunpack.c.l.b16 %v343
        %v1097 = vunpack.c.l.b16 %v344
        %v1098 = vunpack.c.l.b16 %v345
        %v1099 = vunpack.c.l.b16 %v346
        %v1100 = vunpack.c.l.b16 %v347
        %v1101 = vunpack.c.l.b16 %v348
        %v1102 = vunpack.c.l.b16 %v349
        %v1103 = vunpack.c.l.b16 %v350
        %v1104 = vunpack.c.l.b16 %v351
        %v1105 = vunpack.c.l.b16 %v352
        %v1106 = vunpack.c.l.b16 %v353
        %v1107 = vunpack.c.l.b16 %v354
        %v1108 = vunpack.c.l.b16 %v355
        %v1109 = vunpack.c.l.b16 %v356
        %v1110 = vunpack.c.l.b16 %v357
        %v1111 = vunpack.c.l.b16 %v358
        %v1112 = vunpack.c.l.b16 %v359
        %v1113 = vunpack.c.l.b16 %v360
        %v1114 = vunpack.c.l.b16 %v361
        %v1115 = vunpack.c.l.b16 %v362
        %v1116 = vunpack.c.l.b16 %v363
        %v1117 = vunpack.c.l.b16 %v364
        %v1118 = vunpack.c.l.b16 %v365
        %v1119 = vunpack.c.l.b16 %v366
        %v1120 = vunpack.c.l.b16 %v367
        %v1121 = vunpack.c.l.b16 %v368
        %v1122 = vunpack.c.l.b16 %v369
        %v1123 = vunpack.c.l.b16 %v370
        %v1124 = vunpack.c.l.b16 %v371
        %v1125 = vunpack.c.l.b16 %v372
        %v1126 = vunpack.c.l.b16 %v373
        %v1127 = vunpack.c.l.b16 %v374
        %v1128 = vunpack.c.l.b16 %v375
        %v1129 = vunpack.c.l.b16 %v376
        %v1130 = vunpack.c.l.b16 %v377
        %v1131 = vunpack.c.l.b16 %v378
        %v1132 = vunpack.c.l.b16 %v379
        %v1133 = vunpack.c.l.b16 %v380
        %v1134 = vunpack.c.l.b16 %v381
        %v1135 = vunpack.c.l.b16 %v382
        %v1136 = vunpack.c.l.b16 %v383
        %v1137 = vunpack.c.l.b16 %v384
        %v1138 = vunpack.c.l.b16 %v385
        %v1139 = vunpack.c.l.b16 %v386
        %v1140 = vunpack.c.l.b16 %v387
        %v1141 = vunpack.c.l.b16 %v388
        %v1142 = vunpack.c.l.b16 %v389
        %v1143 = vunpack.c.l.b16 %v390
        %v1144 = vunpack.c.l.b16 %v391
        %v1145 = vunpack.c.l.b16 %v392
        %v1146 = vunpack.c.l.b16 %v393
        %v1147 = vunpack.c.l.b16 %v394
        %v1148 = vunpack.c.l.b16 %v395
        %v1149 = vunpack.c.l.b16 %v396
        %v1150 = vunpack.c.l.b16 %v397
        %v1151 = vunpack.c.l.b16 %v398
        %v1152 = vpack.c.b16 %v1089, %v1088
        %v1153 = vpack.c.b16 %v1091, %v1090
        %v1154 = vpack.c.b16 %v1093, %v1092
        %v1155 = vpack.c.b16 %v1095, %v1094
        %v1156 = vpack.c.b16 %v1097, %v1096
        %v1157 = vpack.c.b16 %v1099, %v1098
        %v1158 = vpack.c.b16 %v1101, %v1100
        %v1159 = vpack.c.b16 %v1103, %v1102
        %v1160 = vpack.c.b16 %v1105, %v1104
        %v1161 = vpack.c.b16 %v1107, %v1106
        %v1162 = vpack.c.b16 %v1109, %v1108
        %v1163 = vpack.c.b16 %v1111, %v1110
        %v1164 = vpack.c.b16 %v1113, %v1112
        %v1165 = vpack.c.b16 %v1115, %v1114
        %v1166 = vpack.c.b16 %v1117, %v1116
        %v1167 = vpack.c.b16 %v1119, %v1118
        %v1168 = vpack.c.b16 %v1121, %v1120
        %v1169 = vpack.c.b16 %v1123, %v1122
        %v1170 = vpack.c.b16 %v1125, %v1124
        %v1171 = vpack.c.b16 %v1127, %v1126
        %v1172 = vpack.c.b16 %v1129, %v1128
        %v1173 = vpack.c.b16 %v1131, %v1130
        %v1174 = vpack.c.b16 %v1133, %v1132
        %v1175 = vpack.c.b16 %v1135, %v1134
        %v1176 = vpack.c.b16 %v1137, %v1136
        %v1177 = vpack.c.b16 %v1139, %v1138
        %v1178 = vpack.c.b16 %v1141, %v1140
        %v1179 = vpack.c.b16 %v1143, %v1142
        %v1180 = vpack.c.b16 %v1145, %v1144
        %v1181 = vpack.c.b16 %v1147, %v1146
        %v1182 = vpack.c.b16 %v1149, %v1148
        %v1183 = vpack.c.b16 %v1151, %v1150
        %v1232 = vunpack.c.l.b16 %v399
        %v1233 = vunpack.c.l.b16 %v400
        %v1234 = vunpack.c.l.b16 %v401
        %v1235 = vunpack.c.l.b16 %v402
        %v1236 = vunpack.c.l.b16 %v403
        %v1237 = vunpack.c.l.b16 %v404
        %v1238 = vunpack.c.l.b16 %v405
        %v1239 = vunpack.c.l.b16 %v406
        %v1240 = vunpack.c.l.b16 %v407
        %v1241 = vunpack.c.l.b16 %v408
        %v1242 = vunpack.c.l.b16 %v409
        %v1243 = vunpack.c.l.b16 %v410
        %v1244 = vunpack.c.l.b16 %v411
        %v1245 = vunpack.c.l.b16 %v412
        %v1246 = vunpack.c.l.b16 %v413
        %v1247 = vunpack.c.l.b16 %v414
        %v1248 = vpack.c.b16 %v1233, %v1232
        %v1249 = vpack.c.b16 %v1235, %v1234
        %v1250 = vpack.c.b16 %v1237, %v1236
        %v1251 = vpack.c.b16 %v1239, %v1238
        %v1252 = vpack.c.b16 %v1241, %v1240
        %v1253 = vpack.c.b16 %v1243, %v1242
        %v1254 = vpack.c.b16 %v1245, %v1244
        %v1255 = vpack.c.b16 %v1247, %v1246
        %1264 = vmatprep.subr.bf16.mxu0 0
        %1265 = vmatpush1.bf16.msra.mxu0 %v1248
        %1266 = vmatprep.subr.bf16.mxu0 0
        %1267 = vmatpush1.bf16.msra.mxu0 %v1249
        %1268 = vmatprep.subr.bf16.mxu0 0
        %1269 = vmatpush1.bf16.msra.mxu0 %v1250
        %1270 = vmatprep.subr.bf16.mxu0 0
        %1271 = vmatpush1.bf16.msra.mxu0 %v1251
        %1272 = vmatprep.subr.bf16.mxu0 0
        %1273 = vmatpush1.bf16.msra.mxu0 %v1252
        %1274 = vmatprep.subr.bf16.mxu0 0
        %1275 = vmatpush1.bf16.msra.mxu0 %v1253
        %1276 = vmatprep.subr.bf16.mxu0 0
        %1277 = vmatpush1.bf16.msra.mxu0 %v1254
        %1278 = vmatprep.subr.bf16.mxu0 0
        %1279 = vmatpush1.bf16.msra.mxu0 %v1255
        %1280 = vmatprep.subr.bf16.mxu0 0
        %1281 = vmatpush1.bf16.msra.mxu0 0
        %1282 = vmatprep.subr.bf16.mxu0 0
        %1283 = vmatpush1.bf16.msra.mxu0 0
        %1284 = vmatprep.subr.bf16.mxu0 0
        %1285 = vmatpush1.bf16.msra.mxu0 0
        %1286 = vmatprep.subr.bf16.mxu0 0
        %1287 = vmatpush1.bf16.msra.mxu0 0
        %1288 = vmatprep.subr.bf16.mxu0 0
        %1289 = vmatpush1.bf16.msra.mxu0 0
        %1290 = vmatprep.subr.bf16.mxu0 0
        %1291 = vmatpush1.bf16.msra.mxu0 0
        %1292 = vmatprep.subr.bf16.mxu0 0
        %1293 = vmatpush1.bf16.msra.mxu0 0
        %1294 = vmatprep.subr.bf16.mxu0 0
        %1295 = vmatpush1.bf16.msra.mxu0 0
        %1296 = vmatprep.mubr.bf16.mxu0 0
        %1297 = vmatmul.mubr.bf16.gmra.mrb[0].mxu0 %v1152
        %v1298 = vpop.f32.mrb[0].mxu0
        %v1299 = vadd.f32 %v770, %v1298
        %v1300 = vpop.f32.mrb[0].mxu0
        %v1301 = vpop.f32.mrb[0].mxu0
        %v1302 = vadd.f32 %v773, %v1301
        %v1303 = vpop.f32.mrb[0].mxu0
        %1304 = vmatprep.mubr.bf16.mxu0 0
        %1305 = vmatmul.mubr.bf16.gmra.mrb[0].mxu0 %v1153
        %v1306 = vpop.f32.mrb[0].mxu0
        %v1307 = vadd.f32 %v778, %v1306
        %v1308 = vpop.f32.mrb[0].mxu0
        %v1309 = vpop.f32.mrb[0].mxu0
        %v1310 = vadd.f32 %v781, %v1309
        %v1311 = vpop.f32.mrb[0].mxu0
        %1312 = vmatprep.mubr.bf16.mxu0 0
        %1313 = vmatmul.mubr.bf16.gmra.mrb[0].mxu0 %v1154
        %v1314 = vpop.f32.mrb[0].mxu0
        %v1315 = vadd.f32 %v786, %v1314
        %v1316 = vpop.f32.mrb[0].mxu0
        %v1317 = vpop.f32.mrb[0].mxu0
        %v1318 = vadd.f32 %v789, %v1317
        %v1319 = vpop.f32.mrb[0].mxu0
        %1320 = vmatprep.mubr.bf16.mxu0 0
        %1321 = vmatmul.mubr.bf16.gmra.mrb[0].mxu0 %v1155
        %v1322 = vpop.f32.mrb[0].mxu0
        %v1323 = vadd.f32 %v794, %v1322
        %v1324 = vpop.f32.mrb[0].mxu0
        %v1325 = vpop.f32.mrb[0].mxu0
        %v1326 = vadd.f32 %v797, %v1325
        %v1327 = vpop.f32.mrb[0].mxu0
        %1328 = vmatprep.mubr.bf16.mxu0 0
        %1329 = vmatmul.mubr.bf16.gmra.mrb[0].mxu0 %v1156
        %v1330 = vpop.f32.mrb[0].mxu0
        %v1331 = vadd.f32 %v802, %v1330
        %v1332 = vpop.f32.mrb[0].mxu0
        %v1333 = vpop.f32.mrb[0].mxu0
        %v1334 = vadd.f32 %v805, %v1333
        %v1335 = vpop.f32.mrb[0].mxu0
        %1336 = vmatprep.mubr.bf16.mxu0 0
        %1337 = vmatmul.mubr.bf16.gmra.mrb[0].mxu0 %v1157
        %v1338 = vpop.f32.mrb[0].mxu0
        %v1339 = vadd.f32 %v810, %v1338
        %v1340 = vpop.f32.mrb[0].mxu0
        %v1341 = vpop.f32.mrb[0].mxu0
        %v1342 = vadd.f32 %v813, %v1341
        %v1343 = vpop.f32.mrb[0].mxu0
        %1344 = vmatprep.mubr.bf16.mxu0 0
        %1345 = vmatmul.mubr.bf16.gmra.mrb[0].mxu0 %v1158
        %v1346 = vpop.f32.mrb[0].mxu0
        %v1347 = vadd.f32 %v818, %v1346
        %v1348 = vpop.f32.mrb[0].mxu0
        %v1349 = vpop.f32.mrb[0].mxu0
        %v1350 = vadd.f32 %v821, %v1349
        %v1351 = vpop.f32.mrb[0].mxu0
        %1352 = vmatprep.mubr.bf16.mxu0 0
        %1353 = vmatmul.mubr.bf16.gmra.mrb[0].mxu0 %v1159
        %v1354 = vpop.f32.mrb[0].mxu0
        %v1355 = vadd.f32 %v826, %v1354
        %v1356 = vpop.f32.mrb[0].mxu0
        %v1357 = vpop.f32.mrb[0].mxu0
        %v1358 = vadd.f32 %v829, %v1357
        %v1359 = vpop.f32.mrb[0].mxu0
        %1360 = vmatprep.mubr.bf16.mxu0 0
        %1361 = vmatmul.mubr.bf16.gmra.mrb[0].mxu0 %v1160
        %v1362 = vpop.f32.mrb[0].mxu0
        %v1363 = vadd.f32 %v834, %v1362
        %v1364 = vpop.f32.mrb[0].mxu0
        %v1365 = vpop.f32.mrb[0].mxu0
        %v1366 = vadd.f32 %v837, %v1365
        %v1367 = vpop.f32.mrb[0].mxu0
        %1368 = vmatprep.mubr.bf16.mxu0 0
        %1369 = vmatmul.mubr.bf16.gmra.mrb[0].mxu0 %v1161
        %v1370 = vpop.f32.mrb[0].mxu0
        %v1371 = vadd.f32 %v842, %v1370
        %v1372 = vpop.f32.mrb[0].mxu0
        %v1373 = vpop.f32.mrb[0].mxu0
        %v1374 = vadd.f32 %v845, %v1373
        %v1375 = vpop.f32.mrb[0].mxu0
        %1376 = vmatprep.mubr.bf16.mxu0 0
        %1377 = vmatmul.mubr.bf16.gmra.mrb[0].mxu0 %v1162
        %v1378 = vpop.f32.mrb[0].mxu0
        %v1379 = vadd.f32 %v850, %v1378
        %v1380 = vpop.f32.mrb[0].mxu0
        %v1381 = vpop.f32.mrb[0].mxu0
        %v1382 = vadd.f32 %v853, %v1381
        %v1383 = vpop.f32.mrb[0].mxu0
        %1384 = vmatprep.mubr.bf16.mxu0 0
        %1385 = vmatmul.mubr.bf16.gmra.mrb[0].mxu0 %v1163
        %v1386 = vpop.f32.mrb[0].mxu0
        %v1387 = vadd.f32 %v858, %v1386
        %v1388 = vpop.f32.mrb[0].mxu0
        %v1389 = vpop.f32.mrb[0].mxu0
        %v1390 = vadd.f32 %v861, %v1389
        %v1391 = vpop.f32.mrb[0].mxu0
        %1392 = vmatprep.mubr.bf16.mxu0 0
        %1393 = vmatmul.mubr.bf16.gmra.mrb[0].mxu0 %v1164
        %v1394 = vpop.f32.mrb[0].mxu0
        %v1395 = vadd.f32 %v866, %v1394
        %v1396 = vpop.f32.mrb[0].mxu0
        %v1397 = vpop.f32.mrb[0].mxu0
        %v1398 = vadd.f32 %v869, %v1397
        %v1399 = vpop.f32.mrb[0].mxu0
        %1400 = vmatprep.mubr.bf16.mxu0 0
        %1401 = vmatmul.mubr.bf16.gmra.mrb[0].mxu0 %v1165
        %v1402 = vpop.f32.mrb[0].mxu0
        %v1403 = vadd.f32 %v874, %v1402
        %v1404 = vpop.f32.mrb[0].mxu0
        %v1405 = vpop.f32.mrb[0].mxu0
        %v1406 = vadd.f32 %v877, %v1405
        %v1407 = vpop.f32.mrb[0].mxu0
        %1408 = vmatprep.mubr.bf16.mxu0 0
        %1409 = vmatmul.mubr.bf16.gmra.mrb[0].mxu0 %v1166
        %v1410 = vpop.f32.mrb[0].mxu0
        %v1411 = vadd.f32 %v882, %v1410
        %v1412 = vpop.f32.mrb[0].mxu0
        %v1413 = vpop.f32.mrb[0].mxu0
        %v1414 = vadd.f32 %v885, %v1413
        %v1415 = vpop.f32.mrb[0].mxu0
        %1416 = vmatprep.mubr.bf16.mxu0 0
        %1417 = vmatmul.mubr.bf16.gmra.mrb[0].mxu0 %v1167
        %v1418 = vpop.f32.mrb[0].mxu0
        %v1419 = vadd.f32 %v890, %v1418
        %v1420 = vpop.f32.mrb[0].mxu0
        %v1421 = vpop.f32.mrb[0].mxu0
        %v1422 = vadd.f32 %v893, %v1421
        %v1423 = vpop.f32.mrb[0].mxu0
        %1424 = vmatprep.mubr.bf16.mxu0 0
        %1425 = vmatmul.mubr.bf16.gmra.mrb[0].mxu0 %v1168
        %v1426 = vpop.f32.mrb[0].mxu0
        %v1427 = vadd.f32 %v898, %v1426
        %v1428 = vpop.f32.mrb[0].mxu0
        %v1429 = vpop.f32.mrb[0].mxu0
        %v1430 = vadd.f32 %v901, %v1429
        %v1431 = vpop.f32.mrb[0].mxu0
        %1432 = vmatprep.mubr.bf16.mxu0 0
        %1433 = vmatmul.mubr.bf16.gmra.mrb[0].mxu0 %v1169
        %v1434 = vpop.f32.mrb[0].mxu0
        %v1435 = vadd.f32 %v906, %v1434
        %v1436 = vpop.f32.mrb[0].mxu0
        %v1437 = vpop.f32.mrb[0].mxu0
        %v1438 = vadd.f32 %v909, %v1437
        %v1439 = vpop.f32.mrb[0].mxu0
        %1440 = vmatprep.mubr.bf16.mxu0 0
        %1441 = vmatmul.mubr.bf16.gmra.mrb[0].mxu0 %v1170
        %v1442 = vpop.f32.mrb[0].mxu0
        %v1443 = vadd.f32 %v914, %v1442
        %v1444 = vpop.f32.mrb[0].mxu0
        %v1445 = vpop.f32.mrb[0].mxu0
        %v1446 = vadd.f32 %v917, %v1445
        %v1447 = vpop.f32.mrb[0].mxu0
        %1448 = vmatprep.mubr.bf16.mxu0 0
        %1449 = vmatmul.mubr.bf16.gmra.mrb[0].mxu0 %v1171
        %v1450 = vpop.f32.mrb[0].mxu0
        %v1451 = vadd.f32 %v922, %v1450
        %v1452 = vpop.f32.mrb[0].mxu0
        %v1453 = vpop.f32.mrb[0].mxu0
        %v1454 = vadd.f32 %v925, %v1453
        %v1455 = vpop.f32.mrb[0].mxu0
        %1456 = vmatprep.mubr.bf16.mxu0 0
        %1457 = vmatmul.mubr.bf16.gmra.mrb[0].mxu0 %v1172
        %v1458 = vpop.f32.mrb[0].mxu0
        %v1459 = vadd.f32 %v930, %v1458
        %v1460 = vpop.f32.mrb[0].mxu0
        %v1461 = vpop.f32.mrb[0].mxu0
        %v1462 = vadd.f32 %v933, %v1461
        %v1463 = vpop.f32.mrb[0].mxu0
        %1464 = vmatprep.mubr.bf16.mxu0 0
        %1465 = vmatmul.mubr.bf16.gmra.mrb[0].mxu0 %v1173
        %v1466 = vpop.f32.mrb[0].mxu0
        %v1467 = vadd.f32 %v938, %v1466
        %v1468 = vpop.f32.mrb[0].mxu0
        %v1469 = vpop.f32.mrb[0].mxu0
        %v1470 = vadd.f32 %v941, %v1469
        %v1471 = vpop.f32.mrb[0].mxu0
        %1472 = vmatprep.mubr.bf16.mxu0 0
        %1473 = vmatmul.mubr.bf16.gmra.mrb[0].mxu0 %v1174
        %v1474 = vpop.f32.mrb[0].mxu0
        %v1475 = vadd.f32 %v946, %v1474
        %v1476 = vpop.f32.mrb[0].mxu0
        %v1477 = vpop.f32.mrb[0].mxu0
        %v1478 = vadd.f32 %v949, %v1477
        %v1479 = vpop.f32.mrb[0].mxu0
        %1480 = vmatprep.mubr.bf16.mxu0 0
        %1481 = vmatmul.mubr.bf16.gmra.mrb[0].mxu0 %v1175
        %v1482 = vpop.f32.mrb[0].mxu0
        %v1483 = vadd.f32 %v954, %v1482
        %v1484 = vpop.f32.mrb[0].mxu0
        %v1485 = vpop.f32.mrb[0].mxu0
        %v1486 = vadd.f32 %v957, %v1485
        %v1487 = vpop.f32.mrb[0].mxu0
        %1488 = vmatprep.mubr.bf16.mxu0 0
        %1489 = vmatmul.mubr.bf16.gmra.mrb[0].mxu0 %v1176
        %v1490 = vpop.f32.mrb[0].mxu0
        %v1491 = vadd.f32 %v962, %v1490
        %v1492 = vpop.f32.mrb[0].mxu0
        %v1493 = vpop.f32.mrb[0].mxu0
        %v1494 = vadd.f32 %v965, %v1493
        %v1495 = vpop.f32.mrb[0].mxu0
        %1496 = vmatprep.mubr.bf16.mxu0 0
        %1497 = vmatmul.mubr.bf16.gmra.mrb[0].mxu0 %v1177
        %v1498 = vpop.f32.mrb[0].mxu0
        %v1499 = vadd.f32 %v970, %v1498
        %v1500 = vpop.f32.mrb[0].mxu0
        %v1501 = vpop.f32.mrb[0].mxu0
        %v1502 = vadd.f32 %v973, %v1501
        %v1503 = vpop.f32.mrb[0].mxu0
        %1504 = vmatprep.mubr.bf16.mxu0 0
        %1505 = vmatmul.mubr.bf16.gmra.mrb[0].mxu0 %v1178
        %v1506 = vpop.f32.mrb[0].mxu0
        %v1507 = vadd.f32 %v978, %v1506
        %v1508 = vpop.f32.mrb[0].mxu0
        %v1509 = vpop.f32.mrb[0].mxu0
        %v1510 = vadd.f32 %v981, %v1509
        %v1511 = vpop.f32.mrb[0].mxu0
        %1512 = vmatprep.mubr.bf16.mxu0 0
        %1513 = vmatmul.mubr.bf16.gmra.mrb[0].mxu0 %v1179
        %v1514 = vpop.f32.mrb[0].mxu0
        %v1515 = vadd.f32 %v986, %v1514
        %v1516 = vpop.f32.mrb[0].mxu0
        %v1517 = vpop.f32.mrb[0].mxu0
        %v1518 = vadd.f32 %v989, %v1517
        %v1519 = vpop.f32.mrb[0].mxu0
        %1520 = vmatprep.mubr.bf16.mxu0 0
        %1521 = vmatmul.mubr.bf16.gmra.mrb[0].mxu0 %v1180
        %v1522 = vpop.f32.mrb[0].mxu0
        %v1523 = vadd.f32 %v994, %v1522
        %v1524 = vpop.f32.mrb[0].mxu0
        %v1525 = vpop.f32.mrb[0].mxu0
        %v1526 = vadd.f32 %v997, %v1525
        %v1527 = vpop.f32.mrb[0].mxu0
        %1528 = vmatprep.mubr.bf16.mxu0 0
        %1529 = vmatmul.mubr.bf16.gmra.mrb[0].mxu0 %v1181
        %v1530 = vpop.f32.mrb[0].mxu0
        %v1531 = vadd.f32 %v1002, %v1530
        %v1532 = vpop.f32.mrb[0].mxu0
        %v1533 = vpop.f32.mrb[0].mxu0
        %v1534 = vadd.f32 %v1005, %v1533
        %v1535 = vpop.f32.mrb[0].mxu0
        %1536 = vmatprep.mubr.bf16.mxu0 0
        %1537 = vmatmul.mubr.bf16.gmra.mrb[0].mxu0 %v1182
        %v1538 = vpop.f32.mrb[0].mxu0
        %v1539 = vadd.f32 %v1010, %v1538
        %v1540 = vpop.f32.mrb[0].mxu0
        %v1541 = vpop.f32.mrb[0].mxu0
        %v1542 = vadd.f32 %v1013, %v1541
        %v1543 = vpop.f32.mrb[0].mxu0
        %1544 = vmatprep.mubr.bf16.mxu0 0
        %1545 = vmatmul.mubr.bf16.gmra.mrb[0].mxu0 %v1183
        %v1546 = vpop.f32.mrb[0].mxu0
        %v1547 = vadd.f32 %v1018, %v1546
        %v1548 = vpop.f32.mrb[0].mxu0
        %v1549 = vpop.f32.mrb[0].mxu0
        %v1550 = vadd.f32 %v1021, %v1549
        %v1551 = vpop.f32.mrb[0].mxu0
        %1552 = vdwg.mxu0
        %v1553 = vld [vmem:[%s3] sm:$0x1]
        %v1555 = vlaneseq
        %v1556 = vshrl.u32 %v1555, 7
        %v1557 = vsub.s32 0, %v1556
        %v1558 = vrot.slane %v1553, %v1557
        %v1560 = vadd.f32 %v1299, %v1558
        %v1561 = vadd.f32 %v1302, %v1558
        %v1562 = vadd.f32 %v1307, %v1558
        %v1563 = vadd.f32 %v1310, %v1558
        %v1564 = vadd.f32 %v1315, %v1558
        %v1565 = vadd.f32 %v1318, %v1558
        %v1566 = vadd.f32 %v1323, %v1558
        %v1567 = vadd.f32 %v1326, %v1558
        %v1568 = vadd.f32 %v1331, %v1558
        %v1569 = vadd.f32 %v1334, %v1558
        %v1570 = vadd.f32 %v1339, %v1558
        %v1571 = vadd.f32 %v1342, %v1558
        %v1572 = vadd.f32 %v1347, %v1558
        %v1573 = vadd.f32 %v1350, %v1558
        %v1574 = vadd.f32 %v1355, %v1558
        %v1575 = vadd.f32 %v1358, %v1558
        %v1576 = vadd.f32 %v1363, %v1558
        %v1577 = vadd.f32 %v1366, %v1558
        %v1578 = vadd.f32 %v1371, %v1558
        %v1579 = vadd.f32 %v1374, %v1558
        %v1580 = vadd.f32 %v1379, %v1558
        %v1581 = vadd.f32 %v1382, %v1558
        %v1582 = vadd.f32 %v1387, %v1558
        %v1583 = vadd.f32 %v1390, %v1558
        %v1584 = vadd.f32 %v1395, %v1558
        %v1585 = vadd.f32 %v1398, %v1558
        %v1586 = vadd.f32 %v1403, %v1558
        %v1587 = vadd.f32 %v1406, %v1558
        %v1588 = vadd.f32 %v1411, %v1558
        %v1589 = vadd.f32 %v1414, %v1558
        %v1590 = vadd.f32 %v1419, %v1558
        %v1591 = vadd.f32 %v1422, %v1558
        %v1592 = vadd.f32 %v1427, %v1558
        %v1593 = vadd.f32 %v1430, %v1558
        %v1594 = vadd.f32 %v1435, %v1558
        %v1595 = vadd.f32 %v1438, %v1558
        %v1596 = vadd.f32 %v1443, %v1558
        %v1597 = vadd.f32 %v1446, %v1558
        %v1598 = vadd.f32 %v1451, %v1558
        %v1599 = vadd.f32 %v1454, %v1558
        %v1600 = vadd.f32 %v1459, %v1558
        %v1601 = vadd.f32 %v1462, %v1558
        %v1602 = vadd.f32 %v1467, %v1558
        %v1603 = vadd.f32 %v1470, %v1558
        %v1604 = vadd.f32 %v1475, %v1558
        %v1605 = vadd.f32 %v1478, %v1558
        %v1606 = vadd.f32 %v1483, %v1558
        %v1607 = vadd.f32 %v1486, %v1558
        %v1608 = vadd.f32 %v1491, %v1558
        %v1609 = vadd.f32 %v1494, %v1558
        %v1610 = vadd.f32 %v1499, %v1558
        %v1611 = vadd.f32 %v1502, %v1558
        %v1612 = vadd.f32 %v1507, %v1558
        %v1613 = vadd.f32 %v1510, %v1558
        %v1614 = vadd.f32 %v1515, %v1558
        %v1615 = vadd.f32 %v1518, %v1558
        %v1616 = vadd.f32 %v1523, %v1558
        %v1617 = vadd.f32 %v1526, %v1558
        %v1618 = vadd.f32 %v1531, %v1558
        %v1619 = vadd.f32 %v1534, %v1558
        %v1620 = vadd.f32 %v1539, %v1558
        %v1621 = vadd.f32 %v1542, %v1558
        %v1622 = vadd.f32 %v1547, %v1558
        %v1623 = vadd.f32 %v1550, %v1558
        %v1624 = vmax.f32 %v1560, 0.0
        %v1625 = vmax.f32 %v1561, 0.0
        %v1626 = vmax.f32 %v1562, 0.0
        %v1627 = vmax.f32 %v1563, 0.0
        %v1628 = vmax.f32 %v1564, 0.0
        %v1629 = vmax.f32 %v1565, 0.0
        %v1630 = vmax.f32 %v1566, 0.0
        %v1631 = vmax.f32 %v1567, 0.0
        %v1632 = vmax.f32 %v1568, 0.0
        %v1633 = vmax.f32 %v1569, 0.0
        %v1634 = vmax.f32 %v1570, 0.0
        %v1635 = vmax.f32 %v1571, 0.0
        %v1636 = vmax.f32 %v1572, 0.0
        %v1637 = vmax.f32 %v1573, 0.0
        %v1638 = vmax.f32 %v1574, 0.0
        %v1639 = vmax.f32 %v1575, 0.0
        %v1640 = vmax.f32 %v1576, 0.0
        %v1641 = vmax.f32 %v1577, 0.0
        %v1642 = vmax.f32 %v1578, 0.0
        %v1643 = vmax.f32 %v1579, 0.0
        %v1644 = vmax.f32 %v1580, 0.0
        %v1645 = vmax.f32 %v1581, 0.0
        %v1646 = vmax.f32 %v1582, 0.0
        %v1647 = vmax.f32 %v1583, 0.0
        %v1648 = vmax.f32 %v1584, 0.0
        %v1649 = vmax.f32 %v1585, 0.0
        %v1650 = vmax.f32 %v1586, 0.0
        %v1651 = vmax.f32 %v1587, 0.0
        %v1652 = vmax.f32 %v1588, 0.0
        %v1653 = vmax.f32 %v1589, 0.0
        %v1654 = vmax.f32 %v1590, 0.0
        %v1655 = vmax.f32 %v1591, 0.0
        %v1656 = vmax.f32 %v1592, 0.0
        %v1657 = vmax.f32 %v1593, 0.0
        %v1658 = vmax.f32 %v1594, 0.0
        %v1659 = vmax.f32 %v1595, 0.0
        %v1660 = vmax.f32 %v1596, 0.0
        %v1661 = vmax.f32 %v1597, 0.0
        %v1662 = vmax.f32 %v1598, 0.0
        %v1663 = vmax.f32 %v1599, 0.0
        %v1664 = vmax.f32 %v1600, 0.0
        %v1665 = vmax.f32 %v1601, 0.0
        %v1666 = vmax.f32 %v1602, 0.0
        %v1667 = vmax.f32 %v1603, 0.0
        %v1668 = vmax.f32 %v1604, 0.0
        %v1669 = vmax.f32 %v1605, 0.0
        %v1670 = vmax.f32 %v1606, 0.0
        %v1671 = vmax.f32 %v1607, 0.0
        %v1672 = vmax.f32 %v1608, 0.0
        %v1673 = vmax.f32 %v1609, 0.0
        %v1674 = vmax.f32 %v1610, 0.0
        %v1675 = vmax.f32 %v1611, 0.0
        %v1676 = vmax.f32 %v1612, 0.0
        %v1677 = vmax.f32 %v1613, 0.0
        %v1678 = vmax.f32 %v1614, 0.0
        %v1679 = vmax.f32 %v1615, 0.0
        %v1680 = vmax.f32 %v1616, 0.0
        %v1681 = vmax.f32 %v1617, 0.0
        %v1682 = vmax.f32 %v1618, 0.0
        %v1683 = vmax.f32 %v1619, 0.0
        %v1684 = vmax.f32 %v1620, 0.0
        %v1685 = vmax.f32 %v1621, 0.0
        %v1686 = vmax.f32 %v1622, 0.0
        %v1687 = vmax.f32 %v1623, 0.0
        %v1688 = vld [vmem:[%s4] sm:$0xff]
        %v1689 = vld [vmem:[%s4 + $0x8] sm:$0xff]
        %v1690 = vld [vmem:[%s4 + $0x10] sm:$0xff]
        %v1691 = vld [vmem:[%s4 + $0x18] sm:$0xff]
        %v1692 = vld [vmem:[%s4 + $0x20] sm:$0xff]
        %v1693 = vld [vmem:[%s4 + $0x28] sm:$0xff]
        %v1694 = vld [vmem:[%s4 + $0x30] sm:$0xff]
        %v1695 = vld [vmem:[%s4 + $0x38] sm:$0xff]
        %v1696 = vld [vmem:[%s4 + $0x40] sm:$0xff]
        %v1697 = vld [vmem:[%s4 + $0x48] sm:$0xff]
        %v1698 = vld [vmem:[%s4 + $0x50] sm:$0xff]
        %v1699 = vld [vmem:[%s4 + $0x58] sm:$0xff]
        %v1700 = vld [vmem:[%s4 + $0x60] sm:$0xff]
        %v1701 = vld [vmem:[%s4 + $0x68] sm:$0xff]
        %v1702 = vld [vmem:[%s4 + $0x70] sm:$0xff]
        %v1703 = vld [vmem:[%s4 + $0x78] sm:$0xff]
        %s1704 = sld [smem:[#allocation2]]
        %v1705 = vstv %s1704
        %1706 = vmatprep.subr.mxu0 0.0
        %1707 = vmatpush1.msra.mxu0 %v1688
        %1708 = vmatprep.subr.mxu0 0.0
        %1709 = vmatpush1.msra.mxu0 %v1689
        %1710 = vmatprep.subr.mxu0 0.0
        %1711 = vmatpush1.msra.mxu0 %v1690
        %1712 = vmatprep.subr.mxu0 0.0
        %1713 = vmatpush1.msra.mxu0 %v1691
        %1714 = vmatprep.subr.mxu0 0.0
        %1715 = vmatpush1.msra.mxu0 %v1692
        %1716 = vmatprep.subr.mxu0 0.0
        %1717 = vmatpush1.msra.mxu0 %v1693
        %1718 = vmatprep.subr.mxu0 0.0
        %1719 = vmatpush1.msra.mxu0 %v1694
        %1720 = vmatprep.subr.mxu0 0.0
        %1721 = vmatpush1.msra.mxu0 %v1695
        %1722 = vmatprep.subr.mxu0 0.0
        %1723 = vmatpush1.msra.mxu0 %v1696
        %1724 = vmatprep.subr.mxu0 0.0
        %1725 = vmatpush1.msra.mxu0 %v1697
        %1726 = vmatprep.subr.mxu0 0.0
        %1727 = vmatpush1.msra.mxu0 %v1698
        %1728 = vmatprep.subr.mxu0 0.0
        %1729 = vmatpush1.msra.mxu0 %v1699
        %1730 = vmatprep.subr.mxu0 0.0
        %1731 = vmatpush1.msra.mxu0 %v1700
        %1732 = vmatprep.subr.mxu0 0.0
        %1733 = vmatpush1.msra.mxu0 %v1701
        %1734 = vmatprep.subr.mxu0 0.0
        %1735 = vmatpush1.msra.mxu0 %v1702
        %1736 = vmatprep.subr.mxu0 0.0
        %1737 = vmatpush1.msra.mxu0 %v1703
        %1738 = vmatprep.subr.mxu0 0.0
        %1739 = vmatpush1.msra.mxu0 0.0
        %1740 = vmatprep.subr.mxu0 0.0
        %1741 = vmatpush1.msra.mxu0 0.0
        %1742 = vmatprep.subr.mxu0 0.0
        %1743 = vmatpush1.msra.mxu0 0.0
        %1744 = vmatprep.subr.mxu0 0.0
        %1745 = vmatpush1.msra.mxu0 0.0
        %1746 = vmatprep.subr.mxu0 0.0
        %1747 = vmatpush1.msra.mxu0 0.0
        %1748 = vmatprep.subr.mxu0 0.0
        %1749 = vmatpush1.msra.mxu0 0.0
        %1750 = vmatprep.subr.mxu0 0.0
        %1751 = vmatpush1.msra.mxu0 0.0
        %1752 = vmatprep.subr.mxu0 0.0
        %1753 = vmatpush1.msra.mxu0 0.0
        %1754 = vmatprep.subr.mxu0 0.0
        %1755 = vmatpush1.msra.mxu0 0.0
        %1756 = vmatprep.subr.mxu0 0.0
        %1757 = vmatpush1.msra.mxu0 0.0
        %1758 = vmatprep.subr.mxu0 0.0
        %1759 = vmatpush1.msra.mxu0 0.0
        %1760 = vmatprep.subr.mxu0 0.0
        %1761 = vmatpush1.msra.mxu0 0.0
        %1762 = vmatprep.subr.mxu0 0.0
        %1763 = vmatpush1.msra.mxu0 0.0
        %1764 = vmatprep.subr.mxu0 0.0
        %1765 = vmatpush1.msra.mxu0 0.0
        %1766 = vmatprep.subr.mxu0 0.0
        %1767 = vmatpush1.msra.mxu0 0.0
        %1768 = vmatprep.subr.mxu0 0.0
        %1769 = vmatpush1.msra.mxu0 0.0
        %1770 = vmatprep.mubr.f32.mxu0 0.0
        %1771 = vmatmul.mubr.f32.gmra.mrb[0].mxu0 %v1624
        %v1772 = vpop.f32.mrb[0].mxu0
        %v1773 = vadd.f32 %v1705, %v1772
        %v1774 = vpop.f32.mrb[0].mxu0
        %1775 = vmatprep.mubr.f32.mxu0 0.0
        %1776 = vmatmul.mubr.f32.gmra.mrb[0].mxu0 %v1625
        %v1777 = vpop.f32.mrb[0].mxu0
        %v1778 = vadd.f32 %v1705, %v1777
        %v1779 = vpop.f32.mrb[0].mxu0
        %1780 = vmatprep.mubr.f32.mxu0 0.0
        %1781 = vmatmul.mubr.f32.gmra.mrb[0].mxu0 %v1626
        %v1782 = vpop.f32.mrb[0].mxu0
        %v1783 = vadd.f32 %v1705, %v1782
        %v1784 = vpop.f32.mrb[0].mxu0
        %1785 = vmatprep.mubr.f32.mxu0 0.0
        %1786 = vmatmul.mubr.f32.gmra.mrb[0].mxu0 %v1627
        %v1787 = vpop.f32.mrb[0].mxu0
        %v1788 = vadd.f32 %v1705, %v1787
        %v1789 = vpop.f32.mrb[0].mxu0
        %1790 = vmatprep.mubr.f32.mxu0 0.0
        %1791 = vmatmul.mubr.f32.gmra.mrb[0].mxu0 %v1628
        %v1792 = vpop.f32.mrb[0].mxu0
        %v1793 = vadd.f32 %v1705, %v1792
        %v1794 = vpop.f32.mrb[0].mxu0
        %1795 = vmatprep.mubr.f32.mxu0 0.0
        %1796 = vmatmul.mubr.f32.gmra.mrb[0].mxu0 %v1629
        %v1797 = vpop.f32.mrb[0].mxu0
        %v1798 = vadd.f32 %v1705, %v1797
        %v1799 = vpop.f32.mrb[0].mxu0
        %1800 = vmatprep.mubr.f32.mxu0 0.0
        %1801 = vmatmul.mubr.f32.gmra.mrb[0].mxu0 %v1630
        %v1802 = vpop.f32.mrb[0].mxu0
        %v1803 = vadd.f32 %v1705, %v1802
        %v1804 = vpop.f32.mrb[0].mxu0
        %1805 = vmatprep.mubr.f32.mxu0 0.0
        %1806 = vmatmul.mubr.f32.gmra.mrb[0].mxu0 %v1631
        %v1807 = vpop.f32.mrb[0].mxu0
        %v1808 = vadd.f32 %v1705, %v1807
        %v1809 = vpop.f32.mrb[0].mxu0
        %1810 = vmatprep.mubr.f32.mxu0 0.0
        %1811 = vmatmul.mubr.f32.gmra.mrb[0].mxu0 %v1632
        %v1812 = vpop.f32.mrb[0].mxu0
        %v1813 = vadd.f32 %v1705, %v1812
        %v1814 = vpop.f32.mrb[0].mxu0
        %1815 = vmatprep.mubr.f32.mxu0 0.0
        %1816 = vmatmul.mubr.f32.gmra.mrb[0].mxu0 %v1633
        %v1817 = vpop.f32.mrb[0].mxu0
        %v1818 = vadd.f32 %v1705, %v1817
        %v1819 = vpop.f32.mrb[0].mxu0
        %1820 = vmatprep.mubr.f32.mxu0 0.0
        %1821 = vmatmul.mubr.f32.gmra.mrb[0].mxu0 %v1634
        %v1822 = vpop.f32.mrb[0].mxu0
        %v1823 = vadd.f32 %v1705, %v1822
        %v1824 = vpop.f32.mrb[0].mxu0
        %1825 = vmatprep.mubr.f32.mxu0 0.0
        %1826 = vmatmul.mubr.f32.gmra.mrb[0].mxu0 %v1635
        %v1827 = vpop.f32.mrb[0].mxu0
        %v1828 = vadd.f32 %v1705, %v1827
        %v1829 = vpop.f32.mrb[0].mxu0
        %1830 = vmatprep.mubr.f32.mxu0 0.0
        %1831 = vmatmul.mubr.f32.gmra.mrb[0].mxu0 %v1636
        %v1832 = vpop.f32.mrb[0].mxu0
        %v1833 = vadd.f32 %v1705, %v1832
        %v1834 = vpop.f32.mrb[0].mxu0
        %1835 = vmatprep.mubr.f32.mxu0 0.0
        %1836 = vmatmul.mubr.f32.gmra.mrb[0].mxu0 %v1637
        %v1837 = vpop.f32.mrb[0].mxu0
        %v1838 = vadd.f32 %v1705, %v1837
        %v1839 = vpop.f32.mrb[0].mxu0
        %1840 = vmatprep.mubr.f32.mxu0 0.0
        %1841 = vmatmul.mubr.f32.gmra.mrb[0].mxu0 %v1638
        %v1842 = vpop.f32.mrb[0].mxu0
        %v1843 = vadd.f32 %v1705, %v1842
        %v1844 = vpop.f32.mrb[0].mxu0
        %1845 = vmatprep.mubr.f32.mxu0 0.0
        %1846 = vmatmul.mubr.f32.gmra.mrb[0].mxu0 %v1639
        %v1847 = vpop.f32.mrb[0].mxu0
        %v1848 = vadd.f32 %v1705, %v1847
        %v1849 = vpop.f32.mrb[0].mxu0
        %1850 = vmatprep.mubr.f32.mxu0 0.0
        %1851 = vmatmul.mubr.f32.gmra.mrb[0].mxu0 %v1640
        %v1852 = vpop.f32.mrb[0].mxu0
        %v1853 = vadd.f32 %v1705, %v1852
        %v1854 = vpop.f32.mrb[0].mxu0
        %1855 = vmatprep.mubr.f32.mxu0 0.0
        %1856 = vmatmul.mubr.f32.gmra.mrb[0].mxu0 %v1641
        %v1857 = vpop.f32.mrb[0].mxu0
        %v1858 = vadd.f32 %v1705, %v1857
        %v1859 = vpop.f32.mrb[0].mxu0
        %1860 = vmatprep.mubr.f32.mxu0 0.0
        %1861 = vmatmul.mubr.f32.gmra.mrb[0].mxu0 %v1642
        %v1862 = vpop.f32.mrb[0].mxu0
        %v1863 = vadd.f32 %v1705, %v1862
        %v1864 = vpop.f32.mrb[0].mxu0
        %1865 = vmatprep.mubr.f32.mxu0 0.0
        %1866 = vmatmul.mubr.f32.gmra.mrb[0].mxu0 %v1643
        %v1867 = vpop.f32.mrb[0].mxu0
        %v1868 = vadd.f32 %v1705, %v1867
        %v1869 = vpop.f32.mrb[0].mxu0
        %1870 = vmatprep.mubr.f32.mxu0 0.0
        %1871 = vmatmul.mubr.f32.gmra.mrb[0].mxu0 %v1644
        %v1872 = vpop.f32.mrb[0].mxu0
        %v1873 = vadd.f32 %v1705, %v1872
        %v1874 = vpop.f32.mrb[0].mxu0
        %1875 = vmatprep.mubr.f32.mxu0 0.0
        %1876 = vmatmul.mubr.f32.gmra.mrb[0].mxu0 %v1645
        %v1877 = vpop.f32.mrb[0].mxu0
        %v1878 = vadd.f32 %v1705, %v1877
        %v1879 = vpop.f32.mrb[0].mxu0
        %1880 = vmatprep.mubr.f32.mxu0 0.0
        %1881 = vmatmul.mubr.f32.gmra.mrb[0].mxu0 %v1646
        %v1882 = vpop.f32.mrb[0].mxu0
        %v1883 = vadd.f32 %v1705, %v1882
        %v1884 = vpop.f32.mrb[0].mxu0
        %1885 = vmatprep.mubr.f32.mxu0 0.0
        %1886 = vmatmul.mubr.f32.gmra.mrb[0].mxu0 %v1647
        %v1887 = vpop.f32.mrb[0].mxu0
        %v1888 = vadd.f32 %v1705, %v1887
        %v1889 = vpop.f32.mrb[0].mxu0
        %1890 = vmatprep.mubr.f32.mxu0 0.0
        %1891 = vmatmul.mubr.f32.gmra.mrb[0].mxu0 %v1648
        %v1892 = vpop.f32.mrb[0].mxu0
        %v1893 = vadd.f32 %v1705, %v1892
        %v1894 = vpop.f32.mrb[0].mxu0
        %1895 = vmatprep.mubr.f32.mxu0 0.0
        %1896 = vmatmul.mubr.f32.gmra.mrb[0].mxu0 %v1649
        %v1897 = vpop.f32.mrb[0].mxu0
        %v1898 = vadd.f32 %v1705, %v1897
        %v1899 = vpop.f32.mrb[0].mxu0
        %1900 = vmatprep.mubr.f32.mxu0 0.0
        %1901 = vmatmul.mubr.f32.gmra.mrb[0].mxu0 %v1650
        %v1902 = vpop.f32.mrb[0].mxu0
        %v1903 = vadd.f32 %v1705, %v1902
        %v1904 = vpop.f32.mrb[0].mxu0
        %1905 = vmatprep.mubr.f32.mxu0 0.0
        %1906 = vmatmul.mubr.f32.gmra.mrb[0].mxu0 %v1651
        %v1907 = vpop.f32.mrb[0].mxu0
        %v1908 = vadd.f32 %v1705, %v1907
        %v1909 = vpop.f32.mrb[0].mxu0
        %1910 = vmatprep.mubr.f32.mxu0 0.0
        %1911 = vmatmul.mubr.f32.gmra.mrb[0].mxu0 %v1652
        %v1912 = vpop.f32.mrb[0].mxu0
        %v1913 = vadd.f32 %v1705, %v1912
        %v1914 = vpop.f32.mrb[0].mxu0
        %1915 = vmatprep.mubr.f32.mxu0 0.0
        %1916 = vmatmul.mubr.f32.gmra.mrb[0].mxu0 %v1653
        %v1917 = vpop.f32.mrb[0].mxu0
        %v1918 = vadd.f32 %v1705, %v1917
        %v1919 = vpop.f32.mrb[0].mxu0
        %1920 = vmatprep.mubr.f32.mxu0 0.0
        %1921 = vmatmul.mubr.f32.gmra.mrb[0].mxu0 %v1654
        %v1922 = vpop.f32.mrb[0].mxu0
        %v1923 = vadd.f32 %v1705, %v1922
        %v1924 = vpop.f32.mrb[0].mxu0
        %1925 = vmatprep.mubr.f32.mxu0 0.0
        %1926 = vmatmul.mubr.f32.gmra.mrb[0].mxu0 %v1655
        %v1927 = vpop.f32.mrb[0].mxu0
        %v1928 = vadd.f32 %v1705, %v1927
        %v1929 = vpop.f32.mrb[0].mxu0
        %1930 = vmatprep.mubr.f32.mxu0 0.0
        %1931 = vmatmul.mubr.f32.gmra.mrb[0].mxu0 %v1656
        %v1932 = vpop.f32.mrb[0].mxu0
        %v1933 = vadd.f32 %v1705, %v1932
        %v1934 = vpop.f32.mrb[0].mxu0
        %1935 = vmatprep.mubr.f32.mxu0 0.0
        %1936 = vmatmul.mubr.f32.gmra.mrb[0].mxu0 %v1657
        %v1937 = vpop.f32.mrb[0].mxu0
        %v1938 = vadd.f32 %v1705, %v1937
        %v1939 = vpop.f32.mrb[0].mxu0
        %1940 = vmatprep.mubr.f32.mxu0 0.0
        %1941 = vmatmul.mubr.f32.gmra.mrb[0].mxu0 %v1658
        %v1942 = vpop.f32.mrb[0].mxu0
        %v1943 = vadd.f32 %v1705, %v1942
        %v1944 = vpop.f32.mrb[0].mxu0
        %1945 = vmatprep.mubr.f32.mxu0 0.0
        %1946 = vmatmul.mubr.f32.gmra.mrb[0].mxu0 %v1659
        %v1947 = vpop.f32.mrb[0].mxu0
        %v1948 = vadd.f32 %v1705, %v1947
        %v1949 = vpop.f32.mrb[0].mxu0
        %1950 = vmatprep.mubr.f32.mxu0 0.0
        %1951 = vmatmul.mubr.f32.gmra.mrb[0].mxu0 %v1660
        %v1952 = vpop.f32.mrb[0].mxu0
        %v1953 = vadd.f32 %v1705, %v1952
        %v1954 = vpop.f32.mrb[0].mxu0
        %1955 = vmatprep.mubr.f32.mxu0 0.0
        %1956 = vmatmul.mubr.f32.gmra.mrb[0].mxu0 %v1661
        %v1957 = vpop.f32.mrb[0].mxu0
        %v1958 = vadd.f32 %v1705, %v1957
        %v1959 = vpop.f32.mrb[0].mxu0
        %1960 = vmatprep.mubr.f32.mxu0 0.0
        %1961 = vmatmul.mubr.f32.gmra.mrb[0].mxu0 %v1662
        %v1962 = vpop.f32.mrb[0].mxu0
        %v1963 = vadd.f32 %v1705, %v1962
        %v1964 = vpop.f32.mrb[0].mxu0
        %1965 = vmatprep.mubr.f32.mxu0 0.0
        %1966 = vmatmul.mubr.f32.gmra.mrb[0].mxu0 %v1663
        %v1967 = vpop.f32.mrb[0].mxu0
        %v1968 = vadd.f32 %v1705, %v1967
        %v1969 = vpop.f32.mrb[0].mxu0
        %1970 = vmatprep.mubr.f32.mxu0 0.0
        %1971 = vmatmul.mubr.f32.gmra.mrb[0].mxu0 %v1664
        %v1972 = vpop.f32.mrb[0].mxu0
        %v1973 = vadd.f32 %v1705, %v1972
        %v1974 = vpop.f32.mrb[0].mxu0
        %1975 = vmatprep.mubr.f32.mxu0 0.0
        %1976 = vmatmul.mubr.f32.gmra.mrb[0].mxu0 %v1665
        %v1977 = vpop.f32.mrb[0].mxu0
        %v1978 = vadd.f32 %v1705, %v1977
        %v1979 = vpop.f32.mrb[0].mxu0
        %1980 = vmatprep.mubr.f32.mxu0 0.0
        %1981 = vmatmul.mubr.f32.gmra.mrb[0].mxu0 %v1666
        %v1982 = vpop.f32.mrb[0].mxu0
        %v1983 = vadd.f32 %v1705, %v1982
        %v1984 = vpop.f32.mrb[0].mxu0
        %1985 = vmatprep.mubr.f32.mxu0 0.0
        %1986 = vmatmul.mubr.f32.gmra.mrb[0].mxu0 %v1667
        %v1987 = vpop.f32.mrb[0].mxu0
        %v1988 = vadd.f32 %v1705, %v1987
        %v1989 = vpop.f32.mrb[0].mxu0
        %1990 = vmatprep.mubr.f32.mxu0 0.0
        %1991 = vmatmul.mubr.f32.gmra.mrb[0].mxu0 %v1668
        %v1992 = vpop.f32.mrb[0].mxu0
        %v1993 = vadd.f32 %v1705, %v1992
        %v1994 = vpop.f32.mrb[0].mxu0
        %1995 = vmatprep.mubr.f32.mxu0 0.0
        %1996 = vmatmul.mubr.f32.gmra.mrb[0].mxu0 %v1669
        %v1997 = vpop.f32.mrb[0].mxu0
        %v1998 = vadd.f32 %v1705, %v1997
        %v1999 = vpop.f32.mrb[0].mxu0
        %2000 = vmatprep.mubr.f32.mxu0 0.0
        %2001 = vmatmul.mubr.f32.gmra.mrb[0].mxu0 %v1670
        %v2002 = vpop.f32.mrb[0].mxu0
        %v2003 = vadd.f32 %v1705, %v2002
        %v2004 = vpop.f32.mrb[0].mxu0
        %2005 = vmatprep.mubr.f32.mxu0 0.0
        %2006 = vmatmul.mubr.f32.gmra.mrb[0].mxu0 %v1671
        %v2007 = vpop.f32.mrb[0].mxu0
        %v2008 = vadd.f32 %v1705, %v2007
        %v2009 = vpop.f32.mrb[0].mxu0
        %2010 = vmatprep.mubr.f32.mxu0 0.0
        %2011 = vmatmul.mubr.f32.gmra.mrb[0].mxu0 %v1672
        %v2012 = vpop.f32.mrb[0].mxu0
        %v2013 = vadd.f32 %v1705, %v2012
        %v2014 = vpop.f32.mrb[0].mxu0
        %2015 = vmatprep.mubr.f32.mxu0 0.0
        %2016 = vmatmul.mubr.f32.gmra.mrb[0].mxu0 %v1673
        %v2017 = vpop.f32.mrb[0].mxu0
        %v2018 = vadd.f32 %v1705, %v2017
        %v2019 = vpop.f32.mrb[0].mxu0
        %2020 = vmatprep.mubr.f32.mxu0 0.0
        %2021 = vmatmul.mubr.f32.gmra.mrb[0].mxu0 %v1674
        %v2022 = vpop.f32.mrb[0].mxu0
        %v2023 = vadd.f32 %v1705, %v2022
        %v2024 = vpop.f32.mrb[0].mxu0
        %2025 = vmatprep.mubr.f32.mxu0 0.0
        %2026 = vmatmul.mubr.f32.gmra.mrb[0].mxu0 %v1675
        %v2027 = vpop.f32.mrb[0].mxu0
        %v2028 = vadd.f32 %v1705, %v2027
        %v2029 = vpop.f32.mrb[0].mxu0
        %2030 = vmatprep.mubr.f32.mxu0 0.0
        %2031 = vmatmul.mubr.f32.gmra.mrb[0].mxu0 %v1676
        %v2032 = vpop.f32.mrb[0].mxu0
        %v2033 = vadd.f32 %v1705, %v2032
        %v2034 = vpop.f32.mrb[0].mxu0
        %2035 = vmatprep.mubr.f32.mxu0 0.0
        %2036 = vmatmul.mubr.f32.gmra.mrb[0].mxu0 %v1677
        %v2037 = vpop.f32.mrb[0].mxu0
        %v2038 = vadd.f32 %v1705, %v2037
        %v2039 = vpop.f32.mrb[0].mxu0
        %2040 = vmatprep.mubr.f32.mxu0 0.0
        %2041 = vmatmul.mubr.f32.gmra.mrb[0].mxu0 %v1678
        %v2042 = vpop.f32.mrb[0].mxu0
        %v2043 = vadd.f32 %v1705, %v2042
        %v2044 = vpop.f32.mrb[0].mxu0
        %2045 = vmatprep.mubr.f32.mxu0 0.0
        %2046 = vmatmul.mubr.f32.gmra.mrb[0].mxu0 %v1679
        %v2047 = vpop.f32.mrb[0].mxu0
        %v2048 = vadd.f32 %v1705, %v2047
        %v2049 = vpop.f32.mrb[0].mxu0
        %2050 = vmatprep.mubr.f32.mxu0 0.0
        %2051 = vmatmul.mubr.f32.gmra.mrb[0].mxu0 %v1680
        %v2052 = vpop.f32.mrb[0].mxu0
        %v2053 = vadd.f32 %v1705, %v2052
        %v2054 = vpop.f32.mrb[0].mxu0
        %2055 = vmatprep.mubr.f32.mxu0 0.0
        %2056 = vmatmul.mubr.f32.gmra.mrb[0].mxu0 %v1681
        %v2057 = vpop.f32.mrb[0].mxu0
        %v2058 = vadd.f32 %v1705, %v2057
        %v2059 = vpop.f32.mrb[0].mxu0
        %2060 = vmatprep.mubr.f32.mxu0 0.0
        %2061 = vmatmul.mubr.f32.gmra.mrb[0].mxu0 %v1682
        %v2062 = vpop.f32.mrb[0].mxu0
        %v2063 = vadd.f32 %v1705, %v2062
        %v2064 = vpop.f32.mrb[0].mxu0
        %2065 = vmatprep.mubr.f32.mxu0 0.0
        %2066 = vmatmul.mubr.f32.gmra.mrb[0].mxu0 %v1683
        %v2067 = vpop.f32.mrb[0].mxu0
        %v2068 = vadd.f32 %v1705, %v2067
        %v2069 = vpop.f32.mrb[0].mxu0
        %2070 = vmatprep.mubr.f32.mxu0 0.0
        %2071 = vmatmul.mubr.f32.gmra.mrb[0].mxu0 %v1684
        %v2072 = vpop.f32.mrb[0].mxu0
        %v2073 = vadd.f32 %v1705, %v2072
        %v2074 = vpop.f32.mrb[0].mxu0
        %2075 = vmatprep.mubr.f32.mxu0 0.0
        %2076 = vmatmul.mubr.f32.gmra.mrb[0].mxu0 %v1685
        %v2077 = vpop.f32.mrb[0].mxu0
        %v2078 = vadd.f32 %v1705, %v2077
        %v2079 = vpop.f32.mrb[0].mxu0
        %2080 = vmatprep.mubr.f32.mxu0 0.0
        %2081 = vmatmul.mubr.f32.gmra.mrb[0].mxu0 %v1686
        %v2082 = vpop.f32.mrb[0].mxu0
        %v2083 = vadd.f32 %v1705, %v2082
        %v2084 = vpop.f32.mrb[0].mxu0
        %2085 = vmatprep.mubr.f32.mxu0 0.0
        %2086 = vmatmul.mubr.f32.gmra.mrb[0].mxu0 %v1687
        %v2087 = vpop.f32.mrb[0].mxu0
        %v2088 = vadd.f32 %v1705, %v2087
        %v2089 = vpop.f32.mrb[0].mxu0
        %2090 = vdwg.mxu0
        %v2091 = vxor.u32 %v1773, 2147483648
        %v2092 = vxor.u32 %v1778, 2147483648
        %v2093 = vxor.u32 %v1783, 2147483648
        %v2094 = vxor.u32 %v1788, 2147483648
        %v2095 = vxor.u32 %v1793, 2147483648
        %v2096 = vxor.u32 %v1798, 2147483648
        %v2097 = vxor.u32 %v1803, 2147483648
        %v2098 = vxor.u32 %v1808, 2147483648
        %v2099 = vxor.u32 %v1813, 2147483648
        %v2100 = vxor.u32 %v1818, 2147483648
        %v2101 = vxor.u32 %v1823, 2147483648
        %v2102 = vxor.u32 %v1828, 2147483648
        %v2103 = vxor.u32 %v1833, 2147483648
        %v2104 = vxor.u32 %v1838, 2147483648
        %v2105 = vxor.u32 %v1843, 2147483648
        %v2106 = vxor.u32 %v1848, 2147483648
        %v2107 = vxor.u32 %v1853, 2147483648
        %v2108 = vxor.u32 %v1858, 2147483648
        %v2109 = vxor.u32 %v1863, 2147483648
        %v2110 = vxor.u32 %v1868, 2147483648
        %v2111 = vxor.u32 %v1873, 2147483648
        %v2112 = vxor.u32 %v1878, 2147483648
        %v2113 = vxor.u32 %v1883, 2147483648
        %v2114 = vxor.u32 %v1888, 2147483648
        %v2115 = vxor.u32 %v1893, 2147483648
        %v2116 = vxor.u32 %v1898, 2147483648
        %v2117 = vxor.u32 %v1903, 2147483648
        %v2118 = vxor.u32 %v1908, 2147483648
        %v2119 = vxor.u32 %v1913, 2147483648
        %v2120 = vxor.u32 %v1918, 2147483648
        %v2121 = vxor.u32 %v1923, 2147483648
        %v2122 = vxor.u32 %v1928, 2147483648
        %v2123 = vxor.u32 %v1933, 2147483648
        %v2124 = vxor.u32 %v1938, 2147483648
        %v2125 = vxor.u32 %v1943, 2147483648
        %v2126 = vxor.u32 %v1948, 2147483648
        %v2127 = vxor.u32 %v1953, 2147483648
        %v2128 = vxor.u32 %v1958, 2147483648
        %v2129 = vxor.u32 %v1963, 2147483648
        %v2130 = vxor.u32 %v1968, 2147483648
        %v2131 = vxor.u32 %v1973, 2147483648
        %v2132 = vxor.u32 %v1978, 2147483648
        %v2133 = vxor.u32 %v1983, 2147483648
        %v2134 = vxor.u32 %v1988, 2147483648
        %v2135 = vxor.u32 %v1993, 2147483648
        %v2136 = vxor.u32 %v1998, 2147483648
        %v2137 = vxor.u32 %v2003, 2147483648
        %v2138 = vxor.u32 %v2008, 2147483648
        %v2139 = vxor.u32 %v2013, 2147483648
        %v2140 = vxor.u32 %v2018, 2147483648
        %v2141 = vxor.u32 %v2023, 2147483648
        %v2142 = vxor.u32 %v2028, 2147483648
        %v2143 = vxor.u32 %v2033, 2147483648
        %v2144 = vxor.u32 %v2038, 2147483648
        %v2145 = vxor.u32 %v2043, 2147483648
        %v2146 = vxor.u32 %v2048, 2147483648
        %v2147 = vxor.u32 %v2053, 2147483648
        %v2148 = vxor.u32 %v2058, 2147483648
        %v2149 = vxor.u32 %v2063, 2147483648
        %v2150 = vxor.u32 %v2068, 2147483648
        %v2151 = vxor.u32 %v2073, 2147483648
        %v2152 = vxor.u32 %v2078, 2147483648
        %v2153 = vxor.u32 %v2083, 2147483648
        %v2154 = vxor.u32 %v2088, 2147483648
        %v2155 = vmul.f32 %v2091, 1.442695
        %v2156 = vpow.pop %v2155
        %v2157 = vmul.f32 %v2092, 1.442695
        %v2158 = vpow.pop %v2157
        %v2159 = vmul.f32 %v2093, 1.442695
        %v2160 = vpow.pop %v2159
        %v2161 = vmul.f32 %v2094, 1.442695
        %v2162 = vpow.pop %v2161
        %v2163 = vmul.f32 %v2095, 1.442695
        %v2164 = vpow.pop %v2163
        %v2165 = vmul.f32 %v2096, 1.442695
        %v2166 = vpow.pop %v2165
        %v2167 = vmul.f32 %v2097, 1.442695
        %v2168 = vpow.pop %v2167
        %v2169 = vmul.f32 %v2098, 1.442695
        %v2170 = vpow.pop %v2169
        %v2171 = vmul.f32 %v2099, 1.442695
        %v2172 = vpow.pop %v2171
        %v2173 = vmul.f32 %v2100, 1.442695
        %v2174 = vpow.pop %v2173
        %v2175 = vmul.f32 %v2101, 1.442695
        %v2176 = vpow.pop %v2175
        %v2177 = vmul.f32 %v2102, 1.442695
        %v2178 = vpow.pop %v2177
        %v2179 = vmul.f32 %v2103, 1.442695
        %v2180 = vpow.pop %v2179
        %v2181 = vmul.f32 %v2104, 1.442695
        %v2182 = vpow.pop %v2181
        %v2183 = vmul.f32 %v2105, 1.442695
        %v2184 = vpow.pop %v2183
        %v2185 = vmul.f32 %v2106, 1.442695
        %v2186 = vpow.pop %v2185
        %v2187 = vmul.f32 %v2107, 1.442695
        %v2188 = vpow.pop %v2187
        %v2189 = vmul.f32 %v2108, 1.442695
        %v2190 = vpow.pop %v2189
        %v2191 = vmul.f32 %v2109, 1.442695
        %v2192 = vpow.pop %v2191
        %v2193 = vmul.f32 %v2110, 1.442695
        %v2194 = vpow.pop %v2193
        %v2195 = vmul.f32 %v2111, 1.442695
        %v2196 = vpow.pop %v2195
        %v2197 = vmul.f32 %v2112, 1.442695
        %v2198 = vpow.pop %v2197
        %v2199 = vmul.f32 %v2113, 1.442695
        %v2200 = vpow.pop %v2199
        %v2201 = vmul.f32 %v2114, 1.442695
        %v2202 = vpow.pop %v2201
        %v2203 = vmul.f32 %v2115, 1.442695
        %v2204 = vpow.pop %v2203
        %v2205 = vmul.f32 %v2116, 1.442695
        %v2206 = vpow.pop %v2205
        %v2207 = vmul.f32 %v2117, 1.442695
        %v2208 = vpow.pop %v2207
        %v2209 = vmul.f32 %v2118, 1.442695
        %v2210 = vpow.pop %v2209
        %v2211 = vmul.f32 %v2119, 1.442695
        %v2212 = vpow.pop %v2211
        %v2213 = vmul.f32 %v2120, 1.442695
        %v2214 = vpow.pop %v2213
        %v2215 = vmul.f32 %v2121, 1.442695
        %v2216 = vpow.pop %v2215
        %v2217 = vmul.f32 %v2122, 1.442695
        %v2218 = vpow.pop %v2217
        %v2219 = vmul.f32 %v2123, 1.442695
        %v2220 = vpow.pop %v2219
        %v2221 = vmul.f32 %v2124, 1.442695
        %v2222 = vpow.pop %v2221
        %v2223 = vmul.f32 %v2125, 1.442695
        %v2224 = vpow.pop %v2223
        %v2225 = vmul.f32 %v2126, 1.442695
        %v2226 = vpow.pop %v2225
        %v2227 = vmul.f32 %v2127, 1.442695
        %v2228 = vpow.pop %v2227
        %v2229 = vmul.f32 %v2128, 1.442695
        %v2230 = vpow.pop %v2229
        %v2231 = vmul.f32 %v2129, 1.442695
        %v2232 = vpow.pop %v2231
        %v2233 = vmul.f32 %v2130, 1.442695
        %v2234 = vpow.pop %v2233
        %v2235 = vmul.f32 %v2131, 1.442695
        %v2236 = vpow.pop %v2235
        %v2237 = vmul.f32 %v2132, 1.442695
        %v2238 = vpow.pop %v2237
        %v2239 = vmul.f32 %v2133, 1.442695
        %v2240 = vpow.pop %v2239
        %v2241 = vmul.f32 %v2134, 1.442695
        %v2242 = vpow.pop %v2241
        %v2243 = vmul.f32 %v2135, 1.442695
        %v2244 = vpow.pop %v2243
        %v2245 = vmul.f32 %v2136, 1.442695
        %v2246 = vpow.pop %v2245
        %v2247 = vmul.f32 %v2137, 1.442695
        %v2248 = vpow.pop %v2247
        %v2249 = vmul.f32 %v2138, 1.442695
        %v2250 = vpow.pop %v2249
        %v2251 = vmul.f32 %v2139, 1.442695
        %v2252 = vpow.pop %v2251
        %v2253 = vmul.f32 %v2140, 1.442695
        %v2254 = vpow.pop %v2253
        %v2255 = vmul.f32 %v2141, 1.442695
        %v2256 = vpow.pop %v2255
        %v2257 = vmul.f32 %v2142, 1.442695
        %v2258 = vpow.pop %v2257
        %v2259 = vmul.f32 %v2143, 1.442695
        %v2260 = vpow.pop %v2259
        %v2261 = vmul.f32 %v2144, 1.442695
        %v2262 = vpow.pop %v2261
        %v2263 = vmul.f32 %v2145, 1.442695
        %v2264 = vpow.pop %v2263
        %v2265 = vmul.f32 %v2146, 1.442695
        %v2266 = vpow.pop %v2265
        %v2267 = vmul.f32 %v2147, 1.442695
        %v2268 = vpow.pop %v2267
        %v2269 = vmul.f32 %v2148, 1.442695
        %v2270 = vpow.pop %v2269
        %v2271 = vmul.f32 %v2149, 1.442695
        %v2272 = vpow.pop %v2271
        %v2273 = vmul.f32 %v2150, 1.442695
        %v2274 = vpow.pop %v2273
        %v2275 = vmul.f32 %v2151, 1.442695
        %v2276 = vpow.pop %v2275
        %v2277 = vmul.f32 %v2152, 1.442695
        %v2278 = vpow.pop %v2277
        %v2279 = vmul.f32 %v2153, 1.442695
        %v2280 = vpow.pop %v2279
        %v2281 = vmul.f32 %v2154, 1.442695
        %v2282 = vpow.pop %v2281
        %v2283 = vadd.f32 %v2156, 1.0
        %v2284 = vadd.f32 %v2158, 1.0
        %v2285 = vadd.f32 %v2160, 1.0
        %v2286 = vadd.f32 %v2162, 1.0
        %v2287 = vadd.f32 %v2164, 1.0
        %v2288 = vadd.f32 %v2166, 1.0
        %v2289 = vadd.f32 %v2168, 1.0
        %v2290 = vadd.f32 %v2170, 1.0
        %v2291 = vadd.f32 %v2172, 1.0
        %v2292 = vadd.f32 %v2174, 1.0
        %v2293 = vadd.f32 %v2176, 1.0
        %v2294 = vadd.f32 %v2178, 1.0
        %v2295 = vadd.f32 %v2180, 1.0
        %v2296 = vadd.f32 %v2182, 1.0
        %v2297 = vadd.f32 %v2184, 1.0
        %v2298 = vadd.f32 %v2186, 1.0
        %v2299 = vadd.f32 %v2188, 1.0
        %v2300 = vadd.f32 %v2190, 1.0
        %v2301 = vadd.f32 %v2192, 1.0
        %v2302 = vadd.f32 %v2194, 1.0
        %v2303 = vadd.f32 %v2196, 1.0
        %v2304 = vadd.f32 %v2198, 1.0
        %v2305 = vadd.f32 %v2200, 1.0
        %v2306 = vadd.f32 %v2202, 1.0
        %v2307 = vadd.f32 %v2204, 1.0
        %v2308 = vadd.f32 %v2206, 1.0
        %v2309 = vadd.f32 %v2208, 1.0
        %v2310 = vadd.f32 %v2210, 1.0
        %v2311 = vadd.f32 %v2212, 1.0
        %v2312 = vadd.f32 %v2214, 1.0
        %v2313 = vadd.f32 %v2216, 1.0
        %v2314 = vadd.f32 %v2218, 1.0
        %v2315 = vadd.f32 %v2220, 1.0
        %v2316 = vadd.f32 %v2222, 1.0
        %v2317 = vadd.f32 %v2224, 1.0
        %v2318 = vadd.f32 %v2226, 1.0
        %v2319 = vadd.f32 %v2228, 1.0
        %v2320 = vadd.f32 %v2230, 1.0
        %v2321 = vadd.f32 %v2232, 1.0
        %v2322 = vadd.f32 %v2234, 1.0
        %v2323 = vadd.f32 %v2236, 1.0
        %v2324 = vadd.f32 %v2238, 1.0
        %v2325 = vadd.f32 %v2240, 1.0
        %v2326 = vadd.f32 %v2242, 1.0
        %v2327 = vadd.f32 %v2244, 1.0
        %v2328 = vadd.f32 %v2246, 1.0
        %v2329 = vadd.f32 %v2248, 1.0
        %v2330 = vadd.f32 %v2250, 1.0
        %v2331 = vadd.f32 %v2252, 1.0
        %v2332 = vadd.f32 %v2254, 1.0
        %v2333 = vadd.f32 %v2256, 1.0
        %v2334 = vadd.f32 %v2258, 1.0
        %v2335 = vadd.f32 %v2260, 1.0
        %v2336 = vadd.f32 %v2262, 1.0
        %v2337 = vadd.f32 %v2264, 1.0
        %v2338 = vadd.f32 %v2266, 1.0
        %v2339 = vadd.f32 %v2268, 1.0
        %v2340 = vadd.f32 %v2270, 1.0
        %v2341 = vadd.f32 %v2272, 1.0
        %v2342 = vadd.f32 %v2274, 1.0
        %v2343 = vadd.f32 %v2276, 1.0
        %v2344 = vadd.f32 %v2278, 1.0
        %v2345 = vadd.f32 %v2280, 1.0
        %v2346 = vadd.f32 %v2282, 1.0
        %v2347 = vrcp.pop %v2283
        %v2348 = vmul.f32 1.0, %v2347
        %v2349 = vrcp.pop %v2284
        %v2350 = vmul.f32 1.0, %v2349
        %v2351 = vrcp.pop %v2285
        %v2352 = vmul.f32 1.0, %v2351
        %v2353 = vrcp.pop %v2286
        %v2354 = vmul.f32 1.0, %v2353
        %v2355 = vrcp.pop %v2287
        %v2356 = vmul.f32 1.0, %v2355
        %v2357 = vrcp.pop %v2288
        %v2358 = vmul.f32 1.0, %v2357
        %v2359 = vrcp.pop %v2289
        %v2360 = vmul.f32 1.0, %v2359
        %v2361 = vrcp.pop %v2290
        %v2362 = vmul.f32 1.0, %v2361
        %v2363 = vrcp.pop %v2291
        %v2364 = vmul.f32 1.0, %v2363
        %v2365 = vrcp.pop %v2292
        %v2366 = vmul.f32 1.0, %v2365
        %v2367 = vrcp.pop %v2293
        %v2368 = vmul.f32 1.0, %v2367
        %v2369 = vrcp.pop %v2294
        %v2370 = vmul.f32 1.0, %v2369
        %v2371 = vrcp.pop %v2295
        %v2372 = vmul.f32 1.0, %v2371
        %v2373 = vrcp.pop %v2296
        %v2374 = vmul.f32 1.0, %v2373
        %v2375 = vrcp.pop %v2297
        %v2376 = vmul.f32 1.0, %v2375
        %v2377 = vrcp.pop %v2298
        %v2378 = vmul.f32 1.0, %v2377
        %v2379 = vrcp.pop %v2299
        %v2380 = vmul.f32 1.0, %v2379
        %v2381 = vrcp.pop %v2300
        %v2382 = vmul.f32 1.0, %v2381
        %v2383 = vrcp.pop %v2301
        %v2384 = vmul.f32 1.0, %v2383
        %v2385 = vrcp.pop %v2302
        %v2386 = vmul.f32 1.0, %v2385
        %v2387 = vrcp.pop %v2303
        %v2388 = vmul.f32 1.0, %v2387
        %v2389 = vrcp.pop %v2304
        %v2390 = vmul.f32 1.0, %v2389
        %v2391 = vrcp.pop %v2305
        %v2392 = vmul.f32 1.0, %v2391
        %v2393 = vrcp.pop %v2306
        %v2394 = vmul.f32 1.0, %v2393
        %v2395 = vrcp.pop %v2307
        %v2396 = vmul.f32 1.0, %v2395
        %v2397 = vrcp.pop %v2308
        %v2398 = vmul.f32 1.0, %v2397
        %v2399 = vrcp.pop %v2309
        %v2400 = vmul.f32 1.0, %v2399
        %v2401 = vrcp.pop %v2310
        %v2402 = vmul.f32 1.0, %v2401
        %v2403 = vrcp.pop %v2311
        %v2404 = vmul.f32 1.0, %v2403
        %v2405 = vrcp.pop %v2312
        %v2406 = vmul.f32 1.0, %v2405
        %v2407 = vrcp.pop %v2313
        %v2408 = vmul.f32 1.0, %v2407
        %v2409 = vrcp.pop %v2314
        %v2410 = vmul.f32 1.0, %v2409
        %v2411 = vrcp.pop %v2315
        %v2412 = vmul.f32 1.0, %v2411
        %v2413 = vrcp.pop %v2316
        %v2414 = vmul.f32 1.0, %v2413
        %v2415 = vrcp.pop %v2317
        %v2416 = vmul.f32 1.0, %v2415
        %v2417 = vrcp.pop %v2318
        %v2418 = vmul.f32 1.0, %v2417
        %v2419 = vrcp.pop %v2319
        %v2420 = vmul.f32 1.0, %v2419
        %v2421 = vrcp.pop %v2320
        %v2422 = vmul.f32 1.0, %v2421
        %v2423 = vrcp.pop %v2321
        %v2424 = vmul.f32 1.0, %v2423
        %v2425 = vrcp.pop %v2322
        %v2426 = vmul.f32 1.0, %v2425
        %v2427 = vrcp.pop %v2323
        %v2428 = vmul.f32 1.0, %v2427
        %v2429 = vrcp.pop %v2324
        %v2430 = vmul.f32 1.0, %v2429
        %v2431 = vrcp.pop %v2325
        %v2432 = vmul.f32 1.0, %v2431
        %v2433 = vrcp.pop %v2326
        %v2434 = vmul.f32 1.0, %v2433
        %v2435 = vrcp.pop %v2327
        %v2436 = vmul.f32 1.0, %v2435
        %v2437 = vrcp.pop %v2328
        %v2438 = vmul.f32 1.0, %v2437
        %v2439 = vrcp.pop %v2329
        %v2440 = vmul.f32 1.0, %v2439
        %v2441 = vrcp.pop %v2330
        %v2442 = vmul.f32 1.0, %v2441
        %v2443 = vrcp.pop %v2331
        %v2444 = vmul.f32 1.0, %v2443
        %v2445 = vrcp.pop %v2332
        %v2446 = vmul.f32 1.0, %v2445
        %v2447 = vrcp.pop %v2333
        %v2448 = vmul.f32 1.0, %v2447
        %v2449 = vrcp.pop %v2334
        %v2450 = vmul.f32 1.0, %v2449
        %v2451 = vrcp.pop %v2335
        %v2452 = vmul.f32 1.0, %v2451
        %v2453 = vrcp.pop %v2336
        %v2454 = vmul.f32 1.0, %v2453
        %v2455 = vrcp.pop %v2337
        %v2456 = vmul.f32 1.0, %v2455
        %v2457 = vrcp.pop %v2338
        %v2458 = vmul.f32 1.0, %v2457
        %v2459 = vrcp.pop %v2339
        %v2460 = vmul.f32 1.0, %v2459
        %v2461 = vrcp.pop %v2340
        %v2462 = vmul.f32 1.0, %v2461
        %v2463 = vrcp.pop %v2341
        %v2464 = vmul.f32 1.0, %v2463
        %v2465 = vrcp.pop %v2342
        %v2466 = vmul.f32 1.0, %v2465
        %v2467 = vrcp.pop %v2343
        %v2468 = vmul.f32 1.0, %v2467
        %v2469 = vrcp.pop %v2344
        %v2470 = vmul.f32 1.0, %v2469
        %v2471 = vrcp.pop %v2345
        %v2472 = vmul.f32 1.0, %v2471
        %v2473 = vrcp.pop %v2346
        %v2474 = vmul.f32 1.0, %v2473
        %vm2475 = vcmask 7168
        %2476 = vst.msk [vmem:[%s318] sm:$0xff] %vm2475, %v2348
        %2477 = vst.msk [vmem:[%s318 + $0x8] sm:$0xff] %vm2475, %v2350
        %2478 = vst.msk [vmem:[%s318 + $0x10] sm:$0xff] %vm2475, %v2352
        %2479 = vst.msk [vmem:[%s318 + $0x18] sm:$0xff] %vm2475, %v2354
        %2480 = vst.msk [vmem:[%s318 + $0x20] sm:$0xff] %vm2475, %v2356
        %2481 = vst.msk [vmem:[%s318 + $0x28] sm:$0xff] %vm2475, %v2358
        %2482 = vst.msk [vmem:[%s318 + $0x30] sm:$0xff] %vm2475, %v2360
        %2483 = vst.msk [vmem:[%s318 + $0x38] sm:$0xff] %vm2475, %v2362
        %2484 = vst.msk [vmem:[%s318 + $0x40] sm:$0xff] %vm2475, %v2364
        %2485 = vst.msk [vmem:[%s318 + $0x48] sm:$0xff] %vm2475, %v2366
        %2486 = vst.msk [vmem:[%s318 + $0x50] sm:$0xff] %vm2475, %v2368
        %2487 = vst.msk [vmem:[%s318 + $0x58] sm:$0xff] %vm2475, %v2370
        %2488 = vst.msk [vmem:[%s318 + $0x60] sm:$0xff] %vm2475, %v2372
        %2489 = vst.msk [vmem:[%s318 + $0x68] sm:$0xff] %vm2475, %v2374
        %2490 = vst.msk [vmem:[%s318 + $0x70] sm:$0xff] %vm2475, %v2376
        %2491 = vst.msk [vmem:[%s318 + $0x78] sm:$0xff] %vm2475, %v2378
        %2492 = vst.msk [vmem:[%s318 + $0x80] sm:$0xff] %vm2475, %v2380
        %2493 = vst.msk [vmem:[%s318 + $0x88] sm:$0xff] %vm2475, %v2382
        %2494 = vst.msk [vmem:[%s318 + $0x90] sm:$0xff] %vm2475, %v2384
        %2495 = vst.msk [vmem:[%s318 + $0x98] sm:$0xff] %vm2475, %v2386
        %2496 = vst.msk [vmem:[%s318 + $0xa0] sm:$0xff] %vm2475, %v2388
        %2497 = vst.msk [vmem:[%s318 + $0xa8] sm:$0xff] %vm2475, %v2390
        %2498 = vst.msk [vmem:[%s318 + $0xb0] sm:$0xff] %vm2475, %v2392
        %2499 = vst.msk [vmem:[%s318 + $0xb8] sm:$0xff] %vm2475, %v2394
        %2500 = vst.msk [vmem:[%s318 + $0xc0] sm:$0xff] %vm2475, %v2396
        %2501 = vst.msk [vmem:[%s318 + $0xc8] sm:$0xff] %vm2475, %v2398
        %2502 = vst.msk [vmem:[%s318 + $0xd0] sm:$0xff] %vm2475, %v2400
        %2503 = vst.msk [vmem:[%s318 + $0xd8] sm:$0xff] %vm2475, %v2402
        %2504 = vst.msk [vmem:[%s318 + $0xe0] sm:$0xff] %vm2475, %v2404
        %2505 = vst.msk [vmem:[%s318 + $0xe8] sm:$0xff] %vm2475, %v2406
        %2506 = vst.msk [vmem:[%s318 + $0xf0] sm:$0xff] %vm2475, %v2408
        %2507 = vst.msk [vmem:[%s318 + $0xf8] sm:$0xff] %vm2475, %v2410
        %2508 = vst.msk [vmem:[%s318 + $0x100] sm:$0xff] %vm2475, %v2412
        %2509 = vst.msk [vmem:[%s318 + $0x108] sm:$0xff] %vm2475, %v2414
        %2510 = vst.msk [vmem:[%s318 + $0x110] sm:$0xff] %vm2475, %v2416
        %2511 = vst.msk [vmem:[%s318 + $0x118] sm:$0xff] %vm2475, %v2418
        %2512 = vst.msk [vmem:[%s318 + $0x120] sm:$0xff] %vm2475, %v2420
        %2513 = vst.msk [vmem:[%s318 + $0x128] sm:$0xff] %vm2475, %v2422
        %2514 = vst.msk [vmem:[%s318 + $0x130] sm:$0xff] %vm2475, %v2424
        %2515 = vst.msk [vmem:[%s318 + $0x138] sm:$0xff] %vm2475, %v2426
        %2516 = vst.msk [vmem:[%s318 + $0x140] sm:$0xff] %vm2475, %v2428
        %2517 = vst.msk [vmem:[%s318 + $0x148] sm:$0xff] %vm2475, %v2430
        %2518 = vst.msk [vmem:[%s318 + $0x150] sm:$0xff] %vm2475, %v2432
        %2519 = vst.msk [vmem:[%s318 + $0x158] sm:$0xff] %vm2475, %v2434
        %2520 = vst.msk [vmem:[%s318 + $0x160] sm:$0xff] %vm2475, %v2436
        %2521 = vst.msk [vmem:[%s318 + $0x168] sm:$0xff] %vm2475, %v2438
        %2522 = vst.msk [vmem:[%s318 + $0x170] sm:$0xff] %vm2475, %v2440
        %2523 = vst.msk [vmem:[%s318 + $0x178] sm:$0xff] %vm2475, %v2442
        %2524 = vst.msk [vmem:[%s318 + $0x180] sm:$0xff] %vm2475, %v2444
        %2525 = vst.msk [vmem:[%s318 + $0x188] sm:$0xff] %vm2475, %v2446
        %2526 = vst.msk [vmem:[%s318 + $0x190] sm:$0xff] %vm2475, %v2448
        %2527 = vst.msk [vmem:[%s318 + $0x198] sm:$0xff] %vm2475, %v2450
        %2528 = vst.msk [vmem:[%s318 + $0x1a0] sm:$0xff] %vm2475, %v2452
        %2529 = vst.msk [vmem:[%s318 + $0x1a8] sm:$0xff] %vm2475, %v2454
        %2530 = vst.msk [vmem:[%s318 + $0x1b0] sm:$0xff] %vm2475, %v2456
        %2531 = vst.msk [vmem:[%s318 + $0x1b8] sm:$0xff] %vm2475, %v2458
        %2532 = vst.msk [vmem:[%s318 + $0x1c0] sm:$0xff] %vm2475, %v2460
        %2533 = vst.msk [vmem:[%s318 + $0x1c8] sm:$0xff] %vm2475, %v2462
        %2534 = vst.msk [vmem:[%s318 + $0x1d0] sm:$0xff] %vm2475, %v2464
        %2535 = vst.msk [vmem:[%s318 + $0x1d8] sm:$0xff] %vm2475, %v2466
        %2536 = vst.msk [vmem:[%s318 + $0x1e0] sm:$0xff] %vm2475, %v2468
        %2537 = vst.msk [vmem:[%s318 + $0x1e8] sm:$0xff] %vm2475, %v2470
        %2538 = vst.msk [vmem:[%s318 + $0x1f0] sm:$0xff] %vm2475, %v2472
        %2539 = vst.msk [vmem:[%s318 + $0x1f8] sm:$0xff] %vm2475, %v2474
        %s2540 = sand.u32 %s168, 1
        %s2541 = sand.u32 %s168, 1
        %s2542 = smul.addr %s2541, 512
        %s2543 = scalar_lea.vmem [#allocation7], %s2542
        // Predicated region
        $region53: #{tpu_custom_call.1} parent=43 // pred_check
          %p2544 = pneg %p178
        $region54: #{tpu_custom_call.1} parent=43 // pred_check_branch
          %2546 = sbr.rel (%p2544) target = $region56
        $region55: #{tpu_custom_call.1} parent=43 // pred_region
          %s2547 = smul.u32 64, %s24
          %s2548 = ssub.s32 125, %s2547
          %p2549 = scmp.lt.s32.totalorder %s2548, 64
          %s2550 = scalar_select %p2549, %s2548, 64
          %s2551 = smul.u32 128, %s2550
          %p2552 = scmp.ne.s32.totalorder 0, %s2551
          %s2553 = smul.addr %s2547, 8
          %s2554 = scalar_lea.vmem %s6, %s2553
          // Predicated region
          $region57: #{tpu_custom_call.1} parent=55 // pred_check
            %p2555 = pneg %p2552
          $region58: #{tpu_custom_call.1} parent=55 // pred_check_branch
            %2557 = sbr.rel (%p2555) target = $region60
          $region59: #{tpu_custom_call.1} parent=55 // pred_region
            // Predicated region
            $region61: #{tpu_custom_call.1} parent=59 // pred_check
              _
            $region62: #{tpu_custom_call.1} parent=59 // pred_check_branch
              %2559 = sbr.rel (0) target = $region64
            $region63: #{tpu_custom_call.1} parent=59 // pred_region
              // Predicated region
              $region83: #{tpu_custom_call.1} parent=63 // pred_check
                _
              $region84: #{tpu_custom_call.1} parent=63 // pred_check_branch
                %2734 = sbr.rel (0) target = $region86
              $region85: #{tpu_custom_call.1} parent=63 // pred_region
                %s2735 = sshrl.u32 %s2550, 6
                // While loop
                $region87: #{tpu_custom_call.1} parent=85 // loop_pre_header
                  _
                $region88: #{tpu_custom_call.1} parent=85 // loop_header
                  %s2737 = sphi 0, %s2739
                  %p2738 = scmp.ge.s32.totalorder %s2737, %s2735
                  %s2742 = sphi 0, %s2875
                  %s2743 = sphi %s2543, %s2878
                  %s2744 = sphi %s2554, %s2879
                $region89: #{tpu_custom_call.1} parent=85 // loop_header_branch
                  %2741 = sbr.rel (%p2738) target = $region93
                $region90: #{tpu_custom_call.1} parent=85 // loop_body
                  %v2745 = vld [vmem:[%s2743] sm:$0xff]
                  %2746 = vst [vmem:[%s2744] sm:$0xff] %v2745
                  %v2747 = vld [vmem:[%s2743 + $0x8] sm:$0xff]
                  %2748 = vst [vmem:[%s2744 + $0x8] sm:$0xff] %v2747
                  %v2749 = vld [vmem:[%s2743 + $0x10] sm:$0xff]
                  %2750 = vst [vmem:[%s2744 + $0x10] sm:$0xff] %v2749
                  %v2751 = vld [vmem:[%s2743 + $0x18] sm:$0xff]
                  %2752 = vst [vmem:[%s2744 + $0x18] sm:$0xff] %v2751
                  %v2753 = vld [vmem:[%s2743 + $0x20] sm:$0xff]
                  %2754 = vst [vmem:[%s2744 + $0x20] sm:$0xff] %v2753
                  %v2755 = vld [vmem:[%s2743 + $0x28] sm:$0xff]
                  %2756 = vst [vmem:[%s2744 + $0x28] sm:$0xff] %v2755
                  %v2757 = vld [vmem:[%s2743 + $0x30] sm:$0xff]
                  %2758 = vst [vmem:[%s2744 + $0x30] sm:$0xff] %v2757
                  %v2759 = vld [vmem:[%s2743 + $0x38] sm:$0xff]
                  %2760 = vst [vmem:[%s2744 + $0x38] sm:$0xff] %v2759
                  %v2761 = vld [vmem:[%s2743 + $0x40] sm:$0xff]
                  %2762 = vst [vmem:[%s2744 + $0x40] sm:$0xff] %v2761
                  %v2763 = vld [vmem:[%s2743 + $0x48] sm:$0xff]
                  %2764 = vst [vmem:[%s2744 + $0x48] sm:$0xff] %v2763
                  %v2765 = vld [vmem:[%s2743 + $0x50] sm:$0xff]
                  %2766 = vst [vmem:[%s2744 + $0x50] sm:$0xff] %v2765
                  %v2767 = vld [vmem:[%s2743 + $0x58] sm:$0xff]
                  %2768 = vst [vmem:[%s2744 + $0x58] sm:$0xff] %v2767
                  %v2769 = vld [vmem:[%s2743 + $0x60] sm:$0xff]
                  %2770 = vst [vmem:[%s2744 + $0x60] sm:$0xff] %v2769
                  %v2771 = vld [vmem:[%s2743 + $0x68] sm:$0xff]
                  %2772 = vst [vmem:[%s2744 + $0x68] sm:$0xff] %v2771
                  %v2773 = vld [vmem:[%s2743 + $0x70] sm:$0xff]
                  %2774 = vst [vmem:[%s2744 + $0x70] sm:$0xff] %v2773
                  %v2775 = vld [vmem:[%s2743 + $0x78] sm:$0xff]
                  %2776 = vst [vmem:[%s2744 + $0x78] sm:$0xff] %v2775
                  %v2777 = vld [vmem:[%s2743 + $0x80] sm:$0xff]
                  %2778 = vst [vmem:[%s2744 + $0x80] sm:$0xff] %v2777
                  %v2779 = vld [vmem:[%s2743 + $0x88] sm:$0xff]
                  %2780 = vst [vmem:[%s2744 + $0x88] sm:$0xff] %v2779
                  %v2781 = vld [vmem:[%s2743 + $0x90] sm:$0xff]
                  %2782 = vst [vmem:[%s2744 + $0x90] sm:$0xff] %v2781
                  %v2783 = vld [vmem:[%s2743 + $0x98] sm:$0xff]
                  %2784 = vst [vmem:[%s2744 + $0x98] sm:$0xff] %v2783
                  %v2785 = vld [vmem:[%s2743 + $0xa0] sm:$0xff]
                  %2786 = vst [vmem:[%s2744 + $0xa0] sm:$0xff] %v2785
                  %v2787 = vld [vmem:[%s2743 + $0xa8] sm:$0xff]
                  %2788 = vst [vmem:[%s2744 + $0xa8] sm:$0xff] %v2787
                  %v2789 = vld [vmem:[%s2743 + $0xb0] sm:$0xff]
                  %2790 = vst [vmem:[%s2744 + $0xb0] sm:$0xff] %v2789
                  %v2791 = vld [vmem:[%s2743 + $0xb8] sm:$0xff]
                  %2792 = vst [vmem:[%s2744 + $0xb8] sm:$0xff] %v2791
                  %v2793 = vld [vmem:[%s2743 + $0xc0] sm:$0xff]
                  %2794 = vst [vmem:[%s2744 + $0xc0] sm:$0xff] %v2793
                  %v2795 = vld [vmem:[%s2743 + $0xc8] sm:$0xff]
                  %2796 = vst [vmem:[%s2744 + $0xc8] sm:$0xff] %v2795
                  %v2797 = vld [vmem:[%s2743 + $0xd0] sm:$0xff]
                  %2798 = vst [vmem:[%s2744 + $0xd0] sm:$0xff] %v2797
                  %v2799 = vld [vmem:[%s2743 + $0xd8] sm:$0xff]
                  %2800 = vst [vmem:[%s2744 + $0xd8] sm:$0xff] %v2799
                  %v2801 = vld [vmem:[%s2743 + $0xe0] sm:$0xff]
                  %2802 = vst [vmem:[%s2744 + $0xe0] sm:$0xff] %v2801
                  %v2803 = vld [vmem:[%s2743 + $0xe8] sm:$0xff]
                  %2804 = vst [vmem:[%s2744 + $0xe8] sm:$0xff] %v2803
                  %v2805 = vld [vmem:[%s2743 + $0xf0] sm:$0xff]
                  %2806 = vst [vmem:[%s2744 + $0xf0] sm:$0xff] %v2805
                  %v2807 = vld [vmem:[%s2743 + $0xf8] sm:$0xff]
                  %2808 = vst [vmem:[%s2744 + $0xf8] sm:$0xff] %v2807
                  %v2809 = vld [vmem:[%s2743 + $0x100] sm:$0xff]
                  %2810 = vst [vmem:[%s2744 + $0x100] sm:$0xff] %v2809
                  %v2811 = vld [vmem:[%s2743 + $0x108] sm:$0xff]
                  %2812 = vst [vmem:[%s2744 + $0x108] sm:$0xff] %v2811
                  %v2813 = vld [vmem:[%s2743 + $0x110] sm:$0xff]
                  %2814 = vst [vmem:[%s2744 + $0x110] sm:$0xff] %v2813
                  %v2815 = vld [vmem:[%s2743 + $0x118] sm:$0xff]
                  %2816 = vst [vmem:[%s2744 + $0x118] sm:$0xff] %v2815
                  %v2817 = vld [vmem:[%s2743 + $0x120] sm:$0xff]
                  %2818 = vst [vmem:[%s2744 + $0x120] sm:$0xff] %v2817
                  %v2819 = vld [vmem:[%s2743 + $0x128] sm:$0xff]
                  %2820 = vst [vmem:[%s2744 + $0x128] sm:$0xff] %v2819
                  %v2821 = vld [vmem:[%s2743 + $0x130] sm:$0xff]
                  %2822 = vst [vmem:[%s2744 + $0x130] sm:$0xff] %v2821
                  %v2823 = vld [vmem:[%s2743 + $0x138] sm:$0xff]
                  %2824 = vst [vmem:[%s2744 + $0x138] sm:$0xff] %v2823
                  %v2825 = vld [vmem:[%s2743 + $0x140] sm:$0xff]
                  %2826 = vst [vmem:[%s2744 + $0x140] sm:$0xff] %v2825
                  %v2827 = vld [vmem:[%s2743 + $0x148] sm:$0xff]
                  %2828 = vst [vmem:[%s2744 + $0x148] sm:$0xff] %v2827
                  %v2829 = vld [vmem:[%s2743 + $0x150] sm:$0xff]
                  %2830 = vst [vmem:[%s2744 + $0x150] sm:$0xff] %v2829
                  %v2831 = vld [vmem:[%s2743 + $0x158] sm:$0xff]
                  %2832 = vst [vmem:[%s2744 + $0x158] sm:$0xff] %v2831
                  %v2833 = vld [vmem:[%s2743 + $0x160] sm:$0xff]
                  %2834 = vst [vmem:[%s2744 + $0x160] sm:$0xff] %v2833
                  %v2835 = vld [vmem:[%s2743 + $0x168] sm:$0xff]
                  %2836 = vst [vmem:[%s2744 + $0x168] sm:$0xff] %v2835
                  %v2837 = vld [vmem:[%s2743 + $0x170] sm:$0xff]
                  %2838 = vst [vmem:[%s2744 + $0x170] sm:$0xff] %v2837
                  %v2839 = vld [vmem:[%s2743 + $0x178] sm:$0xff]
                  %2840 = vst [vmem:[%s2744 + $0x178] sm:$0xff] %v2839
                  %v2841 = vld [vmem:[%s2743 + $0x180] sm:$0xff]
                  %2842 = vst [vmem:[%s2744 + $0x180] sm:$0xff] %v2841
                  %v2843 = vld [vmem:[%s2743 + $0x188] sm:$0xff]
                  %2844 = vst [vmem:[%s2744 + $0x188] sm:$0xff] %v2843
                  %v2845 = vld [vmem:[%s2743 + $0x190] sm:$0xff]
                  %2846 = vst [vmem:[%s2744 + $0x190] sm:$0xff] %v2845
                  %v2847 = vld [vmem:[%s2743 + $0x198] sm:$0xff]
                  %2848 = vst [vmem:[%s2744 + $0x198] sm:$0xff] %v2847
                  %v2849 = vld [vmem:[%s2743 + $0x1a0] sm:$0xff]
                  %2850 = vst [vmem:[%s2744 + $0x1a0] sm:$0xff] %v2849
                  %v2851 = vld [vmem:[%s2743 + $0x1a8] sm:$0xff]
                  %2852 = vst [vmem:[%s2744 + $0x1a8] sm:$0xff] %v2851
                  %v2853 = vld [vmem:[%s2743 + $0x1b0] sm:$0xff]
                  %2854 = vst [vmem:[%s2744 + $0x1b0] sm:$0xff] %v2853
                  %v2855 = vld [vmem:[%s2743 + $0x1b8] sm:$0xff]
                  %2856 = vst [vmem:[%s2744 + $0x1b8] sm:$0xff] %v2855
                  %v2857 = vld [vmem:[%s2743 + $0x1c0] sm:$0xff]
                  %2858 = vst [vmem:[%s2744 + $0x1c0] sm:$0xff] %v2857
                  %v2859 = vld [vmem:[%s2743 + $0x1c8] sm:$0xff]
                  %2860 = vst [vmem:[%s2744 + $0x1c8] sm:$0xff] %v2859
                  %v2861 = vld [vmem:[%s2743 + $0x1d0] sm:$0xff]
                  %2862 = vst [vmem:[%s2744 + $0x1d0] sm:$0xff] %v2861
                  %v2863 = vld [vmem:[%s2743 + $0x1d8] sm:$0xff]
                  %2864 = vst [vmem:[%s2744 + $0x1d8] sm:$0xff] %v2863
                  %v2865 = vld [vmem:[%s2743 + $0x1e0] sm:$0xff]
                  %2866 = vst [vmem:[%s2744 + $0x1e0] sm:$0xff] %v2865
                  %v2867 = vld [vmem:[%s2743 + $0x1e8] sm:$0xff]
                  %2868 = vst [vmem:[%s2744 + $0x1e8] sm:$0xff] %v2867
                  %v2869 = vld [vmem:[%s2743 + $0x1f0] sm:$0xff]
                  %2870 = vst [vmem:[%s2744 + $0x1f0] sm:$0xff] %v2869
                  %v2871 = vld [vmem:[%s2743 + $0x1f8] sm:$0xff]
                  %2872 = vst [vmem:[%s2744 + $0x1f8] sm:$0xff] %v2871
                  %s2873 = sadd.s32 1, %s2742
                  %p2874 = scmp.ge.s32.totalorder %s2873, %s2735
                  %s2875 = scalar_select %p2874, 0, %s2873
                  %s2876 = smul.u32 %s2875, 512
                  %s2877 = smul.u32 %s2875, 512
                  %s2878 = scalar_lea.vmem %s2543, %s2876 [#allocation7]
                  %s2879 = scalar_lea.vmem %s2554, %s2877
                $region91: #{tpu_custom_call.1} parent=85 // loop_footer
                  %s2739 = sadd.s32 %s2737, 1
                $region92: #{tpu_custom_call.1} parent=85 // loop_footer_branch
                  %2736 = sbr.rel target = $region88
                $region93: #{tpu_custom_call.1} parent=85 // loop_exit
                  _
                %s2880 = sshrl.u32 %s2550, 6
                %s2881 = sand.u32 %s2550, 63
                %s2882 = smul.u32 %s2880, 64
                %s2883 = smul.u32 8, %s2882
                %s2884 = scalar_lea.vmem %s2543, %s2883 [#allocation7]
                %s2885 = smul.u32 8, %s2882
                %s2886 = scalar_lea.vmem %s2554, %s2885
                // While loop
                $region94: #{tpu_custom_call.1} parent=85 // loop_pre_header
                  _
                $region95: #{tpu_custom_call.1} parent=85 // loop_header
                  %s2888 = sphi 0, %s2890
                  %p2889 = scmp.ge.s32.totalorder %s2888, %s2881
                  %s2893 = sphi 0, %s2900
                  %s2894 = sphi %s2884, %s2903
                  %s2895 = sphi %s2886, %s2904
                $region96: #{tpu_custom_call.1} parent=85 // loop_header_branch
                  %2892 = sbr.rel (%p2889) target = $region100
                $region97: #{tpu_custom_call.1} parent=85 // loop_body
                  %v2896 = vld [vmem:[%s2894] sm:$0xff]
                  %2897 = vst [vmem:[%s2895] sm:$0xff] %v2896
                  %s2898 = sadd.s32 1, %s2893
                  %p2899 = scmp.ge.s32.totalorder %s2898, %s2881
                  %s2900 = scalar_select %p2899, 0, %s2898
                  %s2901 = smul.u32 %s2900, 8
                  %s2902 = smul.u32 %s2900, 8
                  %s2903 = scalar_lea.vmem %s2884, %s2901 [#allocation7]
                  %s2904 = scalar_lea.vmem %s2886, %s2902
                $region98: #{tpu_custom_call.1} parent=85 // loop_footer
                  %s2890 = sadd.s32 %s2888, 1
                $region99: #{tpu_custom_call.1} parent=85 // loop_footer_branch
                  %2887 = sbr.rel target = $region95
                $region100: #{tpu_custom_call.1} parent=85 // loop_exit
                  _
              $region86: #{tpu_custom_call.1} parent=63 // pred_fallthru
                _
              // Predicated region
              $region101: #{tpu_custom_call.1} parent=63 // pred_check
                _
              $region102: #{tpu_custom_call.1} parent=63 // pred_check_branch
                %2906 = sbr.rel target = $region104
              $region103: #{tpu_custom_call.1} parent=63 // pred_region
                _
              $region104: #{tpu_custom_call.1} parent=63 // pred_fallthru
                _
            $region64: #{tpu_custom_call.1} parent=59 // pred_fallthru
              _
            // Predicated region
            $region65: #{tpu_custom_call.1} parent=59 // pred_check
              _
            $region66: #{tpu_custom_call.1} parent=59 // pred_check_branch
              %2561 = sbr.rel target = $region68
            $region67: #{tpu_custom_call.1} parent=59 // pred_region
              %s2563 = sshrl.u32 %s2550, 6
              // While loop
              $region69: #{tpu_custom_call.1} parent=67 // loop_pre_header
                _
              $region70: #{tpu_custom_call.1} parent=67 // loop_header
                %s2565 = sphi 0, %s2567
                %p2566 = scmp.ge.s32.totalorder %s2565, %s2563
                %s2570 = sphi 0, %s2703
                %s2571 = sphi %s2543, %s2706
                %s2572 = sphi %s2554, %s2707
              $region71: #{tpu_custom_call.1} parent=67 // loop_header_branch
                %2569 = sbr.rel (%p2566) target = $region75
              $region72: #{tpu_custom_call.1} parent=67 // loop_body
                %v2573 = vld [vmem:[%s2571] sm:$0xff]
                %2574 = vst [vmem:[%s2572] sm:$0xff] %v2573
                %v2575 = vld [vmem:[%s2571 + $0x8] sm:$0xff]
                %2576 = vst [vmem:[%s2572 + $0x8] sm:$0xff] %v2575
                %v2577 = vld [vmem:[%s2571 + $0x10] sm:$0xff]
                %2578 = vst [vmem:[%s2572 + $0x10] sm:$0xff] %v2577
                %v2579 = vld [vmem:[%s2571 + $0x18] sm:$0xff]
                %2580 = vst [vmem:[%s2572 + $0x18] sm:$0xff] %v2579
                %v2581 = vld [vmem:[%s2571 + $0x20] sm:$0xff]
                %2582 = vst [vmem:[%s2572 + $0x20] sm:$0xff] %v2581
                %v2583 = vld [vmem:[%s2571 + $0x28] sm:$0xff]
                %2584 = vst [vmem:[%s2572 + $0x28] sm:$0xff] %v2583
                %v2585 = vld [vmem:[%s2571 + $0x30] sm:$0xff]
                %2586 = vst [vmem:[%s2572 + $0x30] sm:$0xff] %v2585
                %v2587 = vld [vmem:[%s2571 + $0x38] sm:$0xff]
                %2588 = vst [vmem:[%s2572 + $0x38] sm:$0xff] %v2587
                %v2589 = vld [vmem:[%s2571 + $0x40] sm:$0xff]
                %2590 = vst [vmem:[%s2572 + $0x40] sm:$0xff] %v2589
                %v2591 = vld [vmem:[%s2571 + $0x48] sm:$0xff]
                %2592 = vst [vmem:[%s2572 + $0x48] sm:$0xff] %v2591
                %v2593 = vld [vmem:[%s2571 + $0x50] sm:$0xff]
                %2594 = vst [vmem:[%s2572 + $0x50] sm:$0xff] %v2593
                %v2595 = vld [vmem:[%s2571 + $0x58] sm:$0xff]
                %2596 = vst [vmem:[%s2572 + $0x58] sm:$0xff] %v2595
                %v2597 = vld [vmem:[%s2571 + $0x60] sm:$0xff]
                %2598 = vst [vmem:[%s2572 + $0x60] sm:$0xff] %v2597
                %v2599 = vld [vmem:[%s2571 + $0x68] sm:$0xff]
                %2600 = vst [vmem:[%s2572 + $0x68] sm:$0xff] %v2599
                %v2601 = vld [vmem:[%s2571 + $0x70] sm:$0xff]
                %2602 = vst [vmem:[%s2572 + $0x70] sm:$0xff] %v2601
                %v2603 = vld [vmem:[%s2571 + $0x78] sm:$0xff]
                %2604 = vst [vmem:[%s2572 + $0x78] sm:$0xff] %v2603
                %v2605 = vld [vmem:[%s2571 + $0x80] sm:$0xff]
                %2606 = vst [vmem:[%s2572 + $0x80] sm:$0xff] %v2605
                %v2607 = vld [vmem:[%s2571 + $0x88] sm:$0xff]
                %2608 = vst [vmem:[%s2572 + $0x88] sm:$0xff] %v2607
                %v2609 = vld [vmem:[%s2571 + $0x90] sm:$0xff]
                %2610 = vst [vmem:[%s2572 + $0x90] sm:$0xff] %v2609
                %v2611 = vld [vmem:[%s2571 + $0x98] sm:$0xff]
                %2612 = vst [vmem:[%s2572 + $0x98] sm:$0xff] %v2611
                %v2613 = vld [vmem:[%s2571 + $0xa0] sm:$0xff]
                %2614 = vst [vmem:[%s2572 + $0xa0] sm:$0xff] %v2613
                %v2615 = vld [vmem:[%s2571 + $0xa8] sm:$0xff]
                %2616 = vst [vmem:[%s2572 + $0xa8] sm:$0xff] %v2615
                %v2617 = vld [vmem:[%s2571 + $0xb0] sm:$0xff]
                %2618 = vst [vmem:[%s2572 + $0xb0] sm:$0xff] %v2617
                %v2619 = vld [vmem:[%s2571 + $0xb8] sm:$0xff]
                %2620 = vst [vmem:[%s2572 + $0xb8] sm:$0xff] %v2619
                %v2621 = vld [vmem:[%s2571 + $0xc0] sm:$0xff]
                %2622 = vst [vmem:[%s2572 + $0xc0] sm:$0xff] %v2621
                %v2623 = vld [vmem:[%s2571 + $0xc8] sm:$0xff]
                %2624 = vst [vmem:[%s2572 + $0xc8] sm:$0xff] %v2623
                %v2625 = vld [vmem:[%s2571 + $0xd0] sm:$0xff]
                %2626 = vst [vmem:[%s2572 + $0xd0] sm:$0xff] %v2625
                %v2627 = vld [vmem:[%s2571 + $0xd8] sm:$0xff]
                %2628 = vst [vmem:[%s2572 + $0xd8] sm:$0xff] %v2627
                %v2629 = vld [vmem:[%s2571 + $0xe0] sm:$0xff]
                %2630 = vst [vmem:[%s2572 + $0xe0] sm:$0xff] %v2629
                %v2631 = vld [vmem:[%s2571 + $0xe8] sm:$0xff]
                %2632 = vst [vmem:[%s2572 + $0xe8] sm:$0xff] %v2631
                %v2633 = vld [vmem:[%s2571 + $0xf0] sm:$0xff]
                %2634 = vst [vmem:[%s2572 + $0xf0] sm:$0xff] %v2633
                %v2635 = vld [vmem:[%s2571 + $0xf8] sm:$0xff]
                %2636 = vst [vmem:[%s2572 + $0xf8] sm:$0xff] %v2635
                %v2637 = vld [vmem:[%s2571 + $0x100] sm:$0xff]
                %2638 = vst [vmem:[%s2572 + $0x100] sm:$0xff] %v2637
                %v2639 = vld [vmem:[%s2571 + $0x108] sm:$0xff]
                %2640 = vst [vmem:[%s2572 + $0x108] sm:$0xff] %v2639
                %v2641 = vld [vmem:[%s2571 + $0x110] sm:$0xff]
                %2642 = vst [vmem:[%s2572 + $0x110] sm:$0xff] %v2641
                %v2643 = vld [vmem:[%s2571 + $0x118] sm:$0xff]
                %2644 = vst [vmem:[%s2572 + $0x118] sm:$0xff] %v2643
                %v2645 = vld [vmem:[%s2571 + $0x120] sm:$0xff]
                %2646 = vst [vmem:[%s2572 + $0x120] sm:$0xff] %v2645
                %v2647 = vld [vmem:[%s2571 + $0x128] sm:$0xff]
                %2648 = vst [vmem:[%s2572 + $0x128] sm:$0xff] %v2647
                %v2649 = vld [vmem:[%s2571 + $0x130] sm:$0xff]
                %2650 = vst [vmem:[%s2572 + $0x130] sm:$0xff] %v2649
                %v2651 = vld [vmem:[%s2571 + $0x138] sm:$0xff]
                %2652 = vst [vmem:[%s2572 + $0x138] sm:$0xff] %v2651
                %v2653 = vld [vmem:[%s2571 + $0x140] sm:$0xff]
                %2654 = vst [vmem:[%s2572 + $0x140] sm:$0xff] %v2653
                %v2655 = vld [vmem:[%s2571 + $0x148] sm:$0xff]
                %2656 = vst [vmem:[%s2572 + $0x148] sm:$0xff] %v2655
                %v2657 = vld [vmem:[%s2571 + $0x150] sm:$0xff]
                %2658 = vst [vmem:[%s2572 + $0x150] sm:$0xff] %v2657
                %v2659 = vld [vmem:[%s2571 + $0x158] sm:$0xff]
                %2660 = vst [vmem:[%s2572 + $0x158] sm:$0xff] %v2659
                %v2661 = vld [vmem:[%s2571 + $0x160] sm:$0xff]
                %2662 = vst [vmem:[%s2572 + $0x160] sm:$0xff] %v2661
                %v2663 = vld [vmem:[%s2571 + $0x168] sm:$0xff]
                %2664 = vst [vmem:[%s2572 + $0x168] sm:$0xff] %v2663
                %v2665 = vld [vmem:[%s2571 + $0x170] sm:$0xff]
                %2666 = vst [vmem:[%s2572 + $0x170] sm:$0xff] %v2665
                %v2667 = vld [vmem:[%s2571 + $0x178] sm:$0xff]
                %2668 = vst [vmem:[%s2572 + $0x178] sm:$0xff] %v2667
                %v2669 = vld [vmem:[%s2571 + $0x180] sm:$0xff]
                %2670 = vst [vmem:[%s2572 + $0x180] sm:$0xff] %v2669
                %v2671 = vld [vmem:[%s2571 + $0x188] sm:$0xff]
                %2672 = vst [vmem:[%s2572 + $0x188] sm:$0xff] %v2671
                %v2673 = vld [vmem:[%s2571 + $0x190] sm:$0xff]
                %2674 = vst [vmem:[%s2572 + $0x190] sm:$0xff] %v2673
                %v2675 = vld [vmem:[%s2571 + $0x198] sm:$0xff]
                %2676 = vst [vmem:[%s2572 + $0x198] sm:$0xff] %v2675
                %v2677 = vld [vmem:[%s2571 + $0x1a0] sm:$0xff]
                %2678 = vst [vmem:[%s2572 + $0x1a0] sm:$0xff] %v2677
                %v2679 = vld [vmem:[%s2571 + $0x1a8] sm:$0xff]
                %2680 = vst [vmem:[%s2572 + $0x1a8] sm:$0xff] %v2679
                %v2681 = vld [vmem:[%s2571 + $0x1b0] sm:$0xff]
                %2682 = vst [vmem:[%s2572 + $0x1b0] sm:$0xff] %v2681
                %v2683 = vld [vmem:[%s2571 + $0x1b8] sm:$0xff]
                %2684 = vst [vmem:[%s2572 + $0x1b8] sm:$0xff] %v2683
                %v2685 = vld [vmem:[%s2571 + $0x1c0] sm:$0xff]
                %2686 = vst [vmem:[%s2572 + $0x1c0] sm:$0xff] %v2685
                %v2687 = vld [vmem:[%s2571 + $0x1c8] sm:$0xff]
                %2688 = vst [vmem:[%s2572 + $0x1c8] sm:$0xff] %v2687
                %v2689 = vld [vmem:[%s2571 + $0x1d0] sm:$0xff]
                %2690 = vst [vmem:[%s2572 + $0x1d0] sm:$0xff] %v2689
                %v2691 = vld [vmem:[%s2571 + $0x1d8] sm:$0xff]
                %2692 = vst [vmem:[%s2572 + $0x1d8] sm:$0xff] %v2691
                %v2693 = vld [vmem:[%s2571 + $0x1e0] sm:$0xff]
                %2694 = vst [vmem:[%s2572 + $0x1e0] sm:$0xff] %v2693
                %v2695 = vld [vmem:[%s2571 + $0x1e8] sm:$0xff]
                %2696 = vst [vmem:[%s2572 + $0x1e8] sm:$0xff] %v2695
                %v2697 = vld [vmem:[%s2571 + $0x1f0] sm:$0xff]
                %2698 = vst [vmem:[%s2572 + $0x1f0] sm:$0xff] %v2697
                %v2699 = vld [vmem:[%s2571 + $0x1f8] sm:$0xff]
                %2700 = vst [vmem:[%s2572 + $0x1f8] sm:$0xff] %v2699
                %s2701 = sadd.s32 1, %s2570
                %p2702 = scmp.ge.s32.totalorder %s2701, %s2563
                %s2703 = scalar_select %p2702, 0, %s2701
                %s2704 = smul.u32 %s2703, 512
                %s2705 = smul.u32 %s2703, 512
                %s2706 = scalar_lea.vmem %s2543, %s2704 [#allocation7]
                %s2707 = scalar_lea.vmem %s2554, %s2705
              $region73: #{tpu_custom_call.1} parent=67 // loop_footer
                %s2567 = sadd.s32 %s2565, 1
              $region74: #{tpu_custom_call.1} parent=67 // loop_footer_branch
                %2564 = sbr.rel target = $region70
              $region75: #{tpu_custom_call.1} parent=67 // loop_exit
                _
              %s2708 = sshrl.u32 %s2550, 6
              %s2709 = sand.u32 %s2550, 63
              %s2710 = smul.u32 %s2708, 64
              %s2711 = smul.u32 8, %s2710
              %s2712 = scalar_lea.vmem %s2543, %s2711 [#allocation7]
              %s2713 = smul.u32 8, %s2710
              %s2714 = scalar_lea.vmem %s2554, %s2713
              // While loop
              $region76: #{tpu_custom_call.1} parent=67 // loop_pre_header
                _
              $region77: #{tpu_custom_call.1} parent=67 // loop_header
                %s2716 = sphi 0, %s2718
                %p2717 = scmp.ge.s32.totalorder %s2716, %s2709
                %s2721 = sphi 0, %s2728
                %s2722 = sphi %s2712, %s2731
                %s2723 = sphi %s2714, %s2732
              $region78: #{tpu_custom_call.1} parent=67 // loop_header_branch
                %2720 = sbr.rel (%p2717) target = $region82
              $region79: #{tpu_custom_call.1} parent=67 // loop_body
                %v2724 = vld [vmem:[%s2722] sm:$0xff]
                %2725 = vst [vmem:[%s2723] sm:$0xff] %v2724
                %s2726 = sadd.s32 1, %s2721
                %p2727 = scmp.ge.s32.totalorder %s2726, %s2709
                %s2728 = scalar_select %p2727, 0, %s2726
                %s2729 = smul.u32 %s2728, 8
                %s2730 = smul.u32 %s2728, 8
                %s2731 = scalar_lea.vmem %s2712, %s2729 [#allocation7]
                %s2732 = scalar_lea.vmem %s2714, %s2730
              $region80: #{tpu_custom_call.1} parent=67 // loop_footer
                %s2718 = sadd.s32 %s2716, 1
              $region81: #{tpu_custom_call.1} parent=67 // loop_footer_branch
                %2715 = sbr.rel target = $region77
              $region82: #{tpu_custom_call.1} parent=67 // loop_exit
                _
            $region68: #{tpu_custom_call.1} parent=59 // pred_fallthru
              _
          $region60: #{tpu_custom_call.1} parent=55 // pred_fallthru
            _
          %2907 = vnop
        $region56: #{tpu_custom_call.1} parent=43 // pred_fallthru
          _
      $region44: #{tpu_custom_call.1} parent=5 // pred_fallthru
        _
      %p2908 = scmp.le.s32.totalorder 2, %s19
      // Predicated region
      $region105: #{tpu_custom_call.1} parent=5 // pred_check
        %p2909 = pneg %p2908
      $region106: #{tpu_custom_call.1} parent=5 // pred_check_branch
        %2911 = sbr.rel (%p2909) target = $region108
      $region107: #{tpu_custom_call.1} parent=5 // pred_region
        %s2912 = ssub.s32 %s19, 2
        // Predicated region
        $region109: #{tpu_custom_call.1} parent=107 // pred_check
          %p2913 = pneg %p184
        $region110: #{tpu_custom_call.1} parent=107 // pred_check_branch
          %2915 = sbr.rel (%p2913) target = $region112
        $region111: #{tpu_custom_call.1} parent=107 // pred_region
          %s2916 = sand.u32 %s169, 1
          %s2917 = sand.u32 %s169, 1
          %s2918 = smul.addr %s2917, 512
          %s2919 = scalar_lea.vmem [#allocation7], %s2918
        $region112: #{tpu_custom_call.1} parent=107 // pred_fallthru
          _
      $region108: #{tpu_custom_call.1} parent=5 // pred_fallthru
        _
    $region6: #{tpu_custom_call.1} parent=1 // loop_footer
      %s23 = sadd.s32 1, %s19
    $region7: #{tpu_custom_call.1} parent=1 // loop_footer_branch
      %18 = sbr.rel target = $region3
    $region8: #{tpu_custom_call.1} parent=1 // loop_exit
      _
    %2920 = vsyncpa [#allocation4], 1
    %s2921 = scalar_lea.sflag [#allocation4], 1
    %2922 = vsyncpa %s2921, 1
    %2923 = vsyncpa [#allocation6], 1
    %s2924 = scalar_lea.sflag [#allocation6], 1
    %2925 = vsyncpa %s2924, 1

</llo_original>
